<compile_context>
chip_gen: v7x
topology: tpu7x:2x2x1
jax: 0.10.0
libtpu: 0.0.40
codegen_flags: <defaults>
</compile_context>

<pallas_src>
import jax
import jax.numpy as jnp
import numpy as np
from jax import lax
from jax.experimental import pallas as pl
from jax.experimental.pallas import tpu as pltpu


def _softplus(x):
    # Numerically stable softplus == log(1 + exp(x)); matches
    # torch.nn.functional.softplus(beta=1, threshold=20) to float tolerance.
    return jnp.maximum(x, 0.0) + jnp.log1p(jnp.exp(-jnp.abs(x)))


def encoder_kernel(
    dst_ref, src_ref, dstl_ref, ea_ref,        # edge-tiled inputs
    x_ref, w0_ref, b0_ref,                     # resident inputs
    wi_ref, wj_ref, we_ref, bfs_ref,           # fused CGConv weights (width 2H)
    w1_ref, b1_ref,
    out_ref,                                   # (N, H) output, resident across grid
    h_sc, agg_sc,                              # (N, H) VMEM scratch
):
    f32 = jnp.float32
    e = pl.program_id(0)
    TE = dst_ref.shape[0]
    N, H = h_sc.shape

    # ---- step 0: InputLayer (Linear + ReLU) and accumulator init ----
    @pl.when(e == 0)
    def _():
        h0 = jnp.dot(x_ref[...], w0_ref[...], preferred_element_type=f32) + b0_ref[...]
        h_sc[...] = jnp.maximum(h0, 0.0)
        agg_sc[...] = jnp.zeros_like(agg_sc)

    h = h_sc[...]

    # ---- build one-hot gather tile in-kernel from int32 edge indices ----
    # rows 0..TE-1 select x_i (dst / target), rows TE..2TE-1 select x_j (src).
    # Padded edges carry index -1 -> all-zero one-hot row -> no contribution.
    idx2 = jnp.concatenate([dst_ref[...], src_ref[...]], axis=0)       # (2TE, 1) i32
    cols = lax.broadcasted_iota(jnp.int32, (2 * TE, N), 1)
    gather_oh = (cols == idx2).astype(f32)                             # (2TE, N)

    # single fused gather matmul serving both x_i and x_j
    xij = jnp.dot(gather_oh, h, preferred_element_type=f32)            # (2TE, H)
    x_i = xij[:TE]
    x_j = xij[TE:]

    # ---- CGConv messages: fused f/s linears (output width 2H) ----
    z = (jnp.dot(x_i, wi_ref[...], preferred_element_type=f32)
         + jnp.dot(x_j, wj_ref[...], preferred_element_type=f32)
         + jnp.dot(ea_ref[...], we_ref[...], preferred_element_type=f32)
         + bfs_ref[...])                                               # (TE, 2H)
    zf = z[:, :H]
    zs = z[:, H:]
    msg = jax.nn.sigmoid(zf) * _softplus(zs)                           # (TE, H)

    # ---- scatter-add to target nodes ----
    # Scatter one-hot built directly in transposed (N, TE) orientation from the
    # lane-major copy of dst (no materialized (N, E) matrix, no in-kernel
    # transpose needed): entry [n, t] = (n == dst[t]).
    rows = lax.broadcasted_iota(jnp.int32, (N, TE), 0)
    scatter_oh = (rows == dstl_ref[...]).astype(f32)                   # (N, TE)
    agg_sc[...] += jnp.dot(scatter_oh, msg, preferred_element_type=f32)  # (N, H)

    # ---- last step: residual + ffw MLP (Linear + ReLU) ----
    @pl.when(e == pl.num_programs(0) - 1)
    def _():
        hf = h_sc[...] + agg_sc[...]
        o = jnp.dot(hf, w1_ref[...], preferred_element_type=f32) + b1_ref[...]
        out_ref[...] = jnp.maximum(o, 0.0)


def encoder_forward(x, edge_index, edge_attr, params, *, edge_tile=128):
    N, _ = x.shape
    H = params["w0"].shape[1]
    D = edge_attr.shape[1]
    E = edge_index.shape[1]

    # pad edges up to a multiple of the edge tile; padded edges use index -1
    E_pad = ((E + edge_tile - 1) // edge_tile) * edge_tile
    pad = E_pad - E
    src = edge_index[0].astype(jnp.int32).reshape(E, 1)
    dst = edge_index[1].astype(jnp.int32).reshape(E, 1)
    src = jnp.pad(src, ((0, pad), (0, 0)), constant_values=-1)         # (E_pad, 1)
    dst = jnp.pad(dst, ((0, pad), (0, 0)), constant_values=-1)         # (E_pad, 1)
    dst_lane = dst.reshape(1, E_pad)                                   # (1, E_pad)
    ea = jnp.pad(edge_attr.astype(jnp.float32), ((0, pad), (0, 0)))    # (E_pad, D)

    # fuse CGConv f/s weights along the output dim (width 2H)
    wi = jnp.concatenate([params["wfi"], params["wsi"]], axis=1)       # (H, 2H)
    wj = jnp.concatenate([params["wfj"], params["wsj"]], axis=1)       # (H, 2H)
    we = jnp.concatenate([params["wfe"], params["wse"]], axis=1)       # (D, 2H)
    bfs = jnp.concatenate([params["bf"], params["bs"]], axis=1)        # (1, 2H)

    n_tiles = E_pad // edge_tile

    # Edge-tiled inputs walk with the grid; everything else returns block (0, 0)
    # every step, so it is DMA'd once and stays resident in VMEM.
    edge_idx_spec = pl.BlockSpec((edge_tile, 1), lambda e: (e, 0))
    edge_lane_spec = pl.BlockSpec((1, edge_tile), lambda e: (0, e))
    edge_attr_spec = pl.BlockSpec((edge_tile, D), lambda e: (e, 0))

    def resident(shape):
        nd = len(shape)
        return pl.BlockSpec(shape, lambda e, _nd=nd: (0,) * _nd)

    grid_spec = pltpu.PrefetchScalarGridSpec(
        num_scalar_prefetch=0,
        grid=(n_tiles,),
        in_specs=[
            edge_idx_spec,            # dst  (E_pad, 1)
            edge_idx_spec,            # src  (E_pad, 1)
            edge_lane_spec,           # dst, lane-major (1, E_pad)
            edge_attr_spec,           # edge_attr (E_pad, D)
            resident(x.shape),
            resident(params["w0"].shape), resident(params["b0"].shape),
            resident(wi.shape), resident(wj.shape), resident(we.shape),
            resident(bfs.shape),
            resident(params["w1"].shape), resident(params["b1"].shape),
        ],
        out_specs=pl.BlockSpec((N, H), lambda e: (0, 0)),
        scratch_shapes=[pltpu.VMEM((N, H), jnp.float32),
                        pltpu.VMEM((N, H), jnp.float32)],
    )

    return pl.pallas_call(
        encoder_kernel,
        out_shape=jax.ShapeDtypeStruct((N, H), jnp.float32),
        grid_spec=grid_spec,
        compiler_params=pltpu.CompilerParams(
            # edge axis is a reduction into the resident (N, H) accumulator
            dimension_semantics=("arbitrary",)),
    )(dst, src, dst_lane, ea, x.astype(jnp.float32),
      params["w0"], params["b0"], wi, wj, we, bfs,
      params["w1"], params["b1"])


def encoder_reference(x, edge_index, edge_attr, params):
    """Pure-JAX reference with identical semantics (for correctness check)."""
    h = jnp.maximum(x @ params["w0"] + params["b0"], 0.0)
    src, dst = edge_index[0], edge_index[1]
    x_j = h[src]
    x_i = h[dst]
    zf = x_i @ params["wfi"] + x_j @ params["wfj"] + edge_attr @ params["wfe"] + params["bf"]
    zs = x_i @ params["wsi"] + x_j @ params["wsj"] + edge_attr @ params["wse"] + params["bs"]
    msg = jax.nn.sigmoid(zf) * _softplus(zs)
    agg = jnp.zeros_like(h).at[dst].add(msg)
    h = h + agg
    return jnp.maximum(h @ params["w1"] + params["b1"], 0.0)


if __name__ == "__main__":
    key = jax.random.PRNGKey(0)

    # small graph consistent with the module's forward
    N, E = 64, 200          # nodes, edges  (E pads to 256 -> 2 edge tiles)
    F_IN = 8                # num_node_features
    D = 4                   # num_edge_features
    H = 32                  # hidden_channels
    # num_layers = 1 (single CGConvBlock baked into the kernel)

    ks = jax.random.split(key, 16)
    x = jax.random.normal(ks[0], (N, F_IN), jnp.float32)
    edge_index = jax.random.randint(ks[1], (2, E), 0, N)
    edge_attr = jax.random.normal(ks[2], (E, D), jnp.float32)

    s = 0.1
    params = {
        "w0":  jax.random.normal(ks[3],  (F_IN, H), jnp.float32) * s,
        "b0":  jax.random.normal(ks[4],  (1, H),    jnp.float32) * s,
        # CGConv lin_f weight split over [x_i | x_j | edge_attr]
        "wfi": jax.random.normal(ks[5],  (H, H),    jnp.float32) * s,
        "wfj": jax.random.normal(ks[6],  (H, H),    jnp.float32) * s,
        "wfe": jax.random.normal(ks[7],  (D, H),    jnp.float32) * s,
        "bf":  jax.random.normal(ks[8],  (1, H),    jnp.float32) * s,
        # CGConv lin_s weight split over [x_i | x_j | edge_attr]
        "wsi": jax.random.normal(ks[9],  (H, H),    jnp.float32) * s,
        "wsj": jax.random.normal(ks[10], (H, H),    jnp.float32) * s,
        "wse": jax.random.normal(ks[11], (D, H),    jnp.float32) * s,
        "bs":  jax.random.normal(ks[12], (1, H),    jnp.float32) * s,
        # ffw MLP
        "w1":  jax.random.normal(ks[13], (H, H),    jnp.float32) * s,
        "b1":  jax.random.normal(ks[14], (1, H),    jnp.float32) * s,
    }

    out = encoder_forward(x, edge_index, edge_attr, params)
    out = jax.block_until_ready(out)

    ref = encoder_reference(x, edge_index, edge_attr, params)
    np.testing.assert_allclose(np.asarray(out), np.asarray(ref), rtol=1e-4, atol=1e-5)

    print("KERNEL_OK")
</pallas_src>

<mosaic_0001>
module attributes {stable_mosaic.version = 11 : i64} {
  func.func @encoder_kernel(%arg0: i32, %arg1: memref<128x1xi32, #tpu.memory_space<vmem>>, %arg2: memref<128x1xi32, #tpu.memory_space<vmem>>, %arg3: memref<1x128xi32, #tpu.memory_space<vmem>>, %arg4: memref<128x4xf32, #tpu.memory_space<vmem>>, %arg5: memref<64x8xf32, #tpu.memory_space<vmem>>, %arg6: memref<8x32xf32, #tpu.memory_space<vmem>>, %arg7: memref<1x32xf32, #tpu.memory_space<vmem>>, %arg8: memref<32x64xf32, #tpu.memory_space<vmem>>, %arg9: memref<32x64xf32, #tpu.memory_space<vmem>>, %arg10: memref<4x64xf32, #tpu.memory_space<vmem>>, %arg11: memref<1x64xf32, #tpu.memory_space<vmem>>, %arg12: memref<32x32xf32, #tpu.memory_space<vmem>>, %arg13: memref<1x32xf32, #tpu.memory_space<vmem>>, %arg14: memref<64x32xf32, #tpu.memory_space<vmem>>, %arg15: memref<64x32xf32, #tpu.memory_space<vmem>>, %arg16: memref<64x32xf32, #tpu.memory_space<vmem>>) attributes {dimension_semantics = [#tpu.dimension_semantics<arbitrary>], iteration_bounds = array<i64: 2>, scalar_prefetch = 0 : i64, scratch_operands = 2 : i64, tpu.core_type = #tpu.core_type<tc>, window_params = [{transform_indices = @transform_0, window_bounds = array<i64: 128, 1>}, {transform_indices = @transform_1, window_bounds = array<i64: 128, 1>}, {transform_indices = @transform_2, window_bounds = array<i64: 1, 128>}, {transform_indices = @transform_3, window_bounds = array<i64: 128, 4>}, {pipeline_mode = #tpu.pipeline_mode<synchronous>, transform_indices = @transform_4, window_bounds = array<i64: 64, 8>}, {pipeline_mode = #tpu.pipeline_mode<synchronous>, transform_indices = @transform_5, window_bounds = array<i64: 8, 32>}, {pipeline_mode = #tpu.pipeline_mode<synchronous>, transform_indices = @transform_6, window_bounds = array<i64: 1, 32>}, {pipeline_mode = #tpu.pipeline_mode<synchronous>, transform_indices = @transform_7, window_bounds = array<i64: 32, 64>}, {pipeline_mode = #tpu.pipeline_mode<synchronous>, transform_indices = @transform_8, window_bounds = array<i64: 32, 64>}, {pipeline_mode = #tpu.pipeline_mode<synchronous>, transform_indices = @transform_9, window_bounds = array<i64: 4, 64>}, {pipeline_mode = #tpu.pipeline_mode<synchronous>, transform_indices = @transform_10, window_bounds = array<i64: 1, 64>}, {pipeline_mode = #tpu.pipeline_mode<synchronous>, transform_indices = @transform_11, window_bounds = array<i64: 32, 32>}, {pipeline_mode = #tpu.pipeline_mode<synchronous>, transform_indices = @transform_12, window_bounds = array<i64: 1, 32>}, {pipeline_mode = #tpu.pipeline_mode<synchronous>, transform_indices = @transform_13, window_bounds = array<i64: 64, 32>}]} {
    %c0_i32 = arith.constant 0 : i32
    %0 = arith.cmpi eq, %arg0, %c0_i32 : i32
    %1 = arith.extui %0 : i1 to i32
    %c0_i32_0 = arith.constant 0 : i32
    %2 = arith.cmpi ne, %1, %c0_i32_0 : i32
    scf.if %2 {
      %c0_30 = arith.constant 0 : index
      %c0_31 = arith.constant 0 : index
      %56 = vector.load %arg5[%c0_30, %c0_31] : memref<64x8xf32, #tpu.memory_space<vmem>>, vector<64x8xf32>
      %c0_32 = arith.constant 0 : index
      %c0_33 = arith.constant 0 : index
      %57 = vector.load %arg6[%c0_32, %c0_33] : memref<8x32xf32, #tpu.memory_space<vmem>>, vector<8x32xf32>
      %cst_34 = arith.constant dense<0.000000e+00> : vector<64x32xf32>
      %58 = tpu.matmul %56, %57, %cst_34 {dimension_numbers = #tpu.dot_dimension_numbers<[1], [0], [0], [1], [0, 0, 1, 1], [], []>} : vector<64x8xf32>, vector<8x32xf32>, vector<64x32xf32> -> vector<64x32xf32>
      %c0_35 = arith.constant 0 : index
      %c0_36 = arith.constant 0 : index
      %59 = vector.load %arg7[%c0_35, %c0_36] : memref<1x32xf32, #tpu.memory_space<vmem>>, vector<1x32xf32>
      %60 = vector.broadcast %59 : vector<1x32xf32> to vector<64x32xf32>
      %61 = arith.addf %58, %60 : vector<64x32xf32>
      %cst_37 = arith.constant 0.000000e+00 : f32
      %62 = vector.broadcast %cst_37 : f32 to vector<64x32xf32>
      %63 = arith.maximumf %61, %62 : vector<64x32xf32>
      %c0_38 = arith.constant 0 : index
      %c0_39 = arith.constant 0 : index
      %64 = vector.load %arg15[%c0_38, %c0_39] : memref<64x32xf32, #tpu.memory_space<vmem>>, vector<64x32xf32>
      tpu.vector_store %arg15[%c0_38, %c0_39], %63 {strides = array<i32>} : memref<64x32xf32, #tpu.memory_space<vmem>>, vector<64x32xf32>,
      %cst_40 = arith.constant 0.000000e+00 : f32
      %65 = vector.broadcast %cst_40 : f32 to vector<64x32xf32>
      %c0_41 = arith.constant 0 : index
      %c0_42 = arith.constant 0 : index
      %66 = vector.load %arg16[%c0_41, %c0_42] : memref<64x32xf32, #tpu.memory_space<vmem>>, vector<64x32xf32>
      tpu.vector_store %arg16[%c0_41, %c0_42], %65 {strides = array<i32>} : memref<64x32xf32, #tpu.memory_space<vmem>>, vector<64x32xf32>,
    } else {
    }
    %c0 = arith.constant 0 : index
    %c0_1 = arith.constant 0 : index
    %3 = vector.load %arg15[%c0, %c0_1] : memref<64x32xf32, #tpu.memory_space<vmem>>, vector<64x32xf32>
    %c0_2 = arith.constant 0 : index
    %c0_3 = arith.constant 0 : index
    %4 = vector.load %arg1[%c0_2, %c0_3] : memref<128x1xi32, #tpu.memory_space<vmem>>, vector<128x1xi32>
    %c0_4 = arith.constant 0 : index
    %c0_5 = arith.constant 0 : index
    %5 = vector.load %arg2[%c0_4, %c0_5] : memref<128x1xi32, #tpu.memory_space<vmem>>, vector<128x1xi32>
    %6 = tpu.concatenate %4, %5 in 0 : vector<128x1xi32>, vector<128x1xi32> -> vector<256x1xi32>
    %7 = tpu.iota {dimensions = array<i32: 1>} : vector<256x64xi32>
    %8 = vector.broadcast %6 : vector<256x1xi32> to vector<256x64xi32>
    %9 = arith.cmpi eq, %7, %8 : vector<256x64xi32>
    %10 = arith.extui %9 : vector<256x64xi1> to vector<256x64xi32>
    %11 = arith.sitofp %10 : vector<256x64xi32> to vector<256x64xf32>
    %cst = arith.constant dense<0.000000e+00> : vector<256x32xf32>
    %12 = tpu.matmul %11, %3, %cst {dimension_numbers = #tpu.dot_dimension_numbers<[1], [0], [0], [1], [0, 0, 1, 1], [], []>} : vector<256x64xf32>, vector<64x32xf32>, vector<256x32xf32> -> vector<256x32xf32>
    %13 = vector.extract_strided_slice %12 {offsets = [0, 0], sizes = [128, 32], strides = [1, 1]} : vector<256x32xf32> to vector<128x32xf32>
    %14 = vector.extract_strided_slice %12 {offsets = [128, 0], sizes = [128, 32], strides = [1, 1]} : vector<256x32xf32> to vector<128x32xf32>
    %c0_6 = arith.constant 0 : index
    %c0_7 = arith.constant 0 : index
    %15 = vector.load %arg8[%c0_6, %c0_7] : memref<32x64xf32, #tpu.memory_space<vmem>>, vector<32x64xf32>
    %cst_8 = arith.constant dense<0.000000e+00> : vector<128x64xf32>
    %16 = tpu.matmul %13, %15, %cst_8 {dimension_numbers = #tpu.dot_dimension_numbers<[1], [0], [0], [1], [0, 0, 1, 1], [], []>} : vector<128x32xf32>, vector<32x64xf32>, vector<128x64xf32> -> vector<128x64xf32>
    %c0_9 = arith.constant 0 : index
    %c0_10 = arith.constant 0 : index
    %17 = vector.load %arg9[%c0_9, %c0_10] : memref<32x64xf32, #tpu.memory_space<vmem>>, vector<32x64xf32>
    %cst_11 = arith.constant dense<0.000000e+00> : vector<128x64xf32>
    %18 = tpu.matmul %14, %17, %cst_11 {dimension_numbers = #tpu.dot_dimension_numbers<[1], [0], [0], [1], [0, 0, 1, 1], [], []>} : vector<128x32xf32>, vector<32x64xf32>, vector<128x64xf32> -> vector<128x64xf32>
    %19 = arith.addf %16, %18 : vector<128x64xf32>
    %c0_12 = arith.constant 0 : index
    %c0_13 = arith.constant 0 : index
    %20 = vector.load %arg4[%c0_12, %c0_13] : memref<128x4xf32, #tpu.memory_space<vmem>>, vector<128x4xf32>
    %c0_14 = arith.constant 0 : index
    %c0_15 = arith.constant 0 : index
    %21 = vector.load %arg10[%c0_14, %c0_15] : memref<4x64xf32, #tpu.memory_space<vmem>>, vector<4x64xf32>
    %cst_16 = arith.constant dense<0.000000e+00> : vector<128x64xf32>
    %22 = tpu.matmul %20, %21, %cst_16 {dimension_numbers = #tpu.dot_dimension_numbers<[1], [0], [0], [1], [0, 0, 1, 1], [], []>} : vector<128x4xf32>, vector<4x64xf32>, vector<128x64xf32> -> vector<128x64xf32>
    %23 = arith.addf %19, %22 : vector<128x64xf32>
    %c0_17 = arith.constant 0 : index
    %c0_18 = arith.constant 0 : index
    %24 = vector.load %arg11[%c0_17, %c0_18] : memref<1x64xf32, #tpu.memory_space<vmem>>, vector<1x64xf32>
    %25 = vector.broadcast %24 : vector<1x64xf32> to vector<128x64xf32>
    %26 = arith.addf %23, %25 : vector<128x64xf32>
    %27 = vector.extract_strided_slice %26 {offsets = [0, 0], sizes = [128, 32], strides = [1, 1]} : vector<128x64xf32> to vector<128x32xf32>
    %28 = vector.extract_strided_slice %26 {offsets = [0, 32], sizes = [128, 32], strides = [1, 1]} : vector<128x64xf32> to vector<128x32xf32>
    %29 = arith.negf %27 : vector<128x32xf32>
    %30 = math.exp %29 : vector<128x32xf32>
    %cst_19 = arith.constant 1.000000e+00 : f32
    %31 = vector.broadcast %cst_19 : f32 to vector<128x32xf32>
    %32 = arith.addf %31, %30 : vector<128x32xf32>
    %33 = arith.divf %31, %32 : vector<128x32xf32>
    %cst_20 = arith.constant 0.000000e+00 : f32
    %34 = vector.broadcast %cst_20 : f32 to vector<128x32xf32>
    %35 = arith.maximumf %28, %34 : vector<128x32xf32>
    %36 = math.absf %28 : vector<128x32xf32>
    %cst_21 = arith.constant 0.000000e+00 : f32
    %37 = vector.broadcast %cst_21 : f32 to vector<128x32xf32>
    %38 = arith.subf %37, %36 : vector<128x32xf32>
    %39 = math.exp %38 : vector<128x32xf32>
    %40 = math.log1p %39 : vector<128x32xf32>
    %41 = arith.addf %35, %40 : vector<128x32xf32>
    %42 = arith.mulf %33, %41 : vector<128x32xf32>
    %43 = tpu.iota {dimensions = array<i32: 0>} : vector<64x128xi32>
    %c0_22 = arith.constant 0 : index
    %c0_23 = arith.constant 0 : index
    %44 = vector.load %arg3[%c0_22, %c0_23] : memref<1x128xi32, #tpu.memory_space<vmem>>, vector<1x128xi32>
    %45 = vector.broadcast %44 : vector<1x128xi32> to vector<64x128xi32>
    %46 = arith.cmpi eq, %43, %45 : vector<64x128xi32>
    %47 = arith.extui %46 : vector<64x128xi1> to vector<64x128xi32>
    %48 = arith.sitofp %47 : vector<64x128xi32> to vector<64x128xf32>
    %c0_24 = arith.constant 0 : index
    %c0_25 = arith.constant 0 : index
    %49 = vector.load %arg16[%c0_24, %c0_25] : memref<64x32xf32, #tpu.memory_space<vmem>>, vector<64x32xf32>
    %cst_26 = arith.constant dense<0.000000e+00> : vector<64x32xf32>
    %50 = tpu.matmul %48, %42, %cst_26 {dimension_numbers = #tpu.dot_dimension_numbers<[1], [0], [0], [1], [0, 0, 1, 1], [], []>} : vector<64x128xf32>, vector<128x32xf32>, vector<64x32xf32> -> vector<64x32xf32>
    %51 = arith.addf %49, %50 : vector<64x32xf32>
    %c0_27 = arith.constant 0 : index
    %c0_28 = arith.constant 0 : index
    %52 = vector.load %arg16[%c0_27, %c0_28] : memref<64x32xf32, #tpu.memory_space<vmem>>, vector<64x32xf32>
    tpu.vector_store %arg16[%c0_27, %c0_28], %51 {strides = array<i32>} : memref<64x32xf32, #tpu.memory_space<vmem>>, vector<64x32xf32>,
    %c1_i32 = arith.constant 1 : i32
    %53 = arith.cmpi eq, %arg0, %c1_i32 : i32
    %54 = arith.extui %53 : i1 to i32
    %c0_i32_29 = arith.constant 0 : i32
    %55 = arith.cmpi ne, %54, %c0_i32_29 : i32
    scf.if %55 {
      %c0_30 = arith.constant 0 : index
      %c0_31 = arith.constant 0 : index
      %56 = vector.load %arg15[%c0_30, %c0_31] : memref<64x32xf32, #tpu.memory_space<vmem>>, vector<64x32xf32>
      %c0_32 = arith.constant 0 : index
      %c0_33 = arith.constant 0 : index
      %57 = vector.load %arg16[%c0_32, %c0_33] : memref<64x32xf32, #tpu.memory_space<vmem>>, vector<64x32xf32>
      %58 = arith.addf %56, %57 : vector<64x32xf32>
      %c0_34 = arith.constant 0 : index
      %c0_35 = arith.constant 0 : index
      %59 = vector.load %arg12[%c0_34, %c0_35] : memref<32x32xf32, #tpu.memory_space<vmem>>, vector<32x32xf32>
      %cst_36 = arith.constant dense<0.000000e+00> : vector<64x32xf32>
      %60 = tpu.matmul %58, %59, %cst_36 {dimension_numbers = #tpu.dot_dimension_numbers<[1], [0], [0], [1], [0, 0, 1, 1], [], []>} : vector<64x32xf32>, vector<32x32xf32>, vector<64x32xf32> -> vector<64x32xf32>
      %c0_37 = arith.constant 0 : index
      %c0_38 = arith.constant 0 : index
      %61 = vector.load %arg13[%c0_37, %c0_38] : memref<1x32xf32, #tpu.memory_space<vmem>>, vector<1x32xf32>
      %62 = vector.broadcast %61 : vector<1x32xf32> to vector<64x32xf32>
      %63 = arith.addf %60, %62 : vector<64x32xf32>
      %cst_39 = arith.constant 0.000000e+00 : f32
      %64 = vector.broadcast %cst_39 : f32 to vector<64x32xf32>
      %65 = arith.maximumf %63, %64 : vector<64x32xf32>
      %c0_40 = arith.constant 0 : index
      %c0_41 = arith.constant 0 : index
      %66 = vector.load %arg14[%c0_40, %c0_41] : memref<64x32xf32, #tpu.memory_space<vmem>>, vector<64x32xf32>
      tpu.vector_store %arg14[%c0_40, %c0_41], %65 {strides = array<i32>} : memref<64x32xf32, #tpu.memory_space<vmem>>, vector<64x32xf32>,
    } else {
    }
    return
  }
  func.func @transform_0(%arg0: i32) -> (i32, i32) {
    %c0_i32 = arith.constant 0 : i32
    %c0_i32_0 = arith.constant 0 : i32
    return %arg0, %c0_i32 : i32, i32
  }
  func.func @transform_1(%arg0: i32) -> (i32, i32) {
    %c0_i32 = arith.constant 0 : i32
    %c0_i32_0 = arith.constant 0 : i32
    return %arg0, %c0_i32 : i32, i32
  }
  func.func @transform_2(%arg0: i32) -> (i32, i32) {
    %c0_i32 = arith.constant 0 : i32
    %c0_i32_0 = arith.constant 0 : i32
    return %c0_i32, %arg0 : i32, i32
  }
  func.func @transform_3(%arg0: i32) -> (i32, i32) {
    %c0_i32 = arith.constant 0 : i32
    %c0_i32_0 = arith.constant 0 : i32
    return %arg0, %c0_i32 : i32, i32
  }
  func.func @transform_4(%arg0: i32) -> (i32, i32) {
    %c0_i32 = arith.constant 0 : i32
    %c0_i32_0 = arith.constant 0 : i32
    %c0_i32_1 = arith.constant 0 : i32
    return %c0_i32, %c0_i32_0 : i32, i32
  }
  func.func @transform_5(%arg0: i32) -> (i32, i32) {
    %c0_i32 = arith.constant 0 : i32
    %c0_i32_0 = arith.constant 0 : i32
    %c0_i32_1 = arith.constant 0 : i32
    return %c0_i32, %c0_i32_0 : i32, i32
  }
  func.func @transform_6(%arg0: i32) -> (i32, i32) {
    %c0_i32 = arith.constant 0 : i32
    %c0_i32_0 = arith.constant 0 : i32
    %c0_i32_1 = arith.constant 0 : i32
    return %c0_i32, %c0_i32_0 : i32, i32
  }
  func.func @transform_7(%arg0: i32) -> (i32, i32) {
    %c0_i32 = arith.constant 0 : i32
    %c0_i32_0 = arith.constant 0 : i32
    %c0_i32_1 = arith.constant 0 : i32
    return %c0_i32, %c0_i32_0 : i32, i32
  }
  func.func @transform_8(%arg0: i32) -> (i32, i32) {
    %c0_i32 = arith.constant 0 : i32
    %c0_i32_0 = arith.constant 0 : i32
    %c0_i32_1 = arith.constant 0 : i32
    return %c0_i32, %c0_i32_0 : i32, i32
  }
  func.func @transform_9(%arg0: i32) -> (i32, i32) {
    %c0_i32 = arith.constant 0 : i32
    %c0_i32_0 = arith.constant 0 : i32
    %c0_i32_1 = arith.constant 0 : i32
    return %c0_i32, %c0_i32_0 : i32, i32
  }
  func.func @transform_10(%arg0: i32) -> (i32, i32) {
    %c0_i32 = arith.constant 0 : i32
    %c0_i32_0 = arith.constant 0 : i32
    %c0_i32_1 = arith.constant 0 : i32
    return %c0_i32, %c0_i32_0 : i32, i32
  }
  func.func @transform_11(%arg0: i32) -> (i32, i32) {
    %c0_i32 = arith.constant 0 : i32
    %c0_i32_0 = arith.constant 0 : i32
    %c0_i32_1 = arith.constant 0 : i32
    return %c0_i32, %c0_i32_0 : i32, i32
  }
  func.func @transform_12(%arg0: i32) -> (i32, i32) {
    %c0_i32 = arith.constant 0 : i32
    %c0_i32_0 = arith.constant 0 : i32
    %c0_i32_1 = arith.constant 0 : i32
    return %c0_i32, %c0_i32_0 : i32, i32
  }
  func.func @transform_13(%arg0: i32) -> (i32, i32) {
    %c0_i32 = arith.constant 0 : i32
    %c0_i32_0 = arith.constant 0 : i32
    %c0_i32_1 = arith.constant 0 : i32
    return %c0_i32, %c0_i32_0 : i32, i32
  }
}

</mosaic_0001>

<llo_original>
// kernel: tpu_custom_call.1
$region0: #{tpu_custom_call.1}
  #allocation0 [shape = 'u32[]', space=smem, size = 0x4, offset = 0x4, fixed_abs, tag = 'smem constant byte address 0x4 - core index']
  #allocation1 [shape = 'u32[144,128]{1,0:T(1,128)}', space=vmem, size = 0x12000, scoped, tag = 'internal scratch']
  #allocation2 [shape = 'f32[64,32]{1,0:T(8,128)}', space=vmem, size = 0x8000, scoped, tag = 'scratch operand']
  #allocation3 [shape = 'f32[64,32]{1,0:T(8,128)}', space=vmem, size = 0x8000, scoped, tag = 'scratch operand']
  %s0 = inlined_call_operand.vmem [shape: s32[256,1], index: 0, kind: input, shape index: {}]
  %s1 = inlined_call_operand.vmem [shape: s32[256,1], index: 1, kind: input, shape index: {}]
  %s2 = inlined_call_operand.vmem [shape: s32[1,256], index: 2, kind: input, shape index: {}]
  %s3 = inlined_call_operand.vmem [shape: f32[256,4], index: 3, kind: input, shape index: {}]
  %s4 = inlined_call_operand.vmem [shape: f32[64,8], index: 4, kind: input, shape index: {}]
  %s5 = inlined_call_operand.vmem [shape: f32[8,32], index: 5, kind: input, shape index: {}]
  %s6 = inlined_call_operand.vmem [shape: f32[1,32], index: 6, kind: input, shape index: {}]
  %s7 = inlined_call_operand.vmem [shape: f32[32,64], index: 7, kind: input, shape index: {}]
  %s8 = inlined_call_operand.vmem [shape: f32[32,64], index: 8, kind: input, shape index: {}]
  %s9 = inlined_call_operand.vmem [shape: f32[4,64], index: 9, kind: input, shape index: {}]
  %s10 = inlined_call_operand.vmem [shape: f32[1,64], index: 10, kind: input, shape index: {}]
  %s11 = inlined_call_operand.vmem [shape: f32[32,32], index: 11, kind: input, shape index: {}]
  %s12 = inlined_call_operand.vmem [shape: f32[1,32], index: 12, kind: input, shape index: {}]
  %s13 = inlined_call_operand.vmem [shape: f32[64,32], index: 13, kind: output, shape index: {}]
  %s14 = sld [smem:[#allocation0]]
  $region93: #{tpu_custom_call.1} parent=0
    _
  %s16 = ssub.s32 1, %s14
  %s17 = scalar_select 0, %s16, %s14
  loop: start=0, step=1, limit=4
  $region2: #{tpu_custom_call.1} parent=0 // loop_pre_header
    _
  $region3: #{tpu_custom_call.1} parent=0 // loop_header
    %s19 = sphi 0, %s23
    %p20 = scmp.ge.s32.totalorder %s19, 4
    %s29 = sphi 0, %s31
    %s32 = sphi 0, %s29
    %s33 = sphi 0, %s32
    %s49 = sphi 0, %s33
    %s55 = sphi 0, %s57
    %s58 = sphi 0, %s55
    %s59 = sphi 0, %s58
    %s75 = sphi 0, %s59
    %s81 = sphi 0, %s83
    %s84 = sphi 0, %s81
    %s85 = sphi 0, %s84
    %s101 = sphi 0, %s85
    %s107 = sphi 0, %s109
    %s110 = sphi 0, %s107
    %s111 = sphi 0, %s110
    %s127 = sphi 0, %s111
    %s131 = sphi 0, %s131
    %s133 = sphi 0, %s131
    %s134 = sphi 0, %s133
    %s148 = sphi 0, %s134
    %s152 = sphi 0, %s152
    %s154 = sphi 0, %s152
    %s155 = sphi 0, %s154
    %s169 = sphi 0, %s155
    %s173 = sphi 0, %s173
    %s175 = sphi 0, %s173
    %s176 = sphi 0, %s175
    %s190 = sphi 0, %s176
    %s194 = sphi 0, %s194
    %s196 = sphi 0, %s194
    %s197 = sphi 0, %s196
    %s211 = sphi 0, %s197
    %s215 = sphi 0, %s215
    %s217 = sphi 0, %s215
    %s218 = sphi 0, %s217
    %s232 = sphi 0, %s218
    %s236 = sphi 0, %s236
    %s238 = sphi 0, %s236
    %s239 = sphi 0, %s238
    %s253 = sphi 0, %s239
    %s257 = sphi 0, %s257
    %s259 = sphi 0, %s257
    %s260 = sphi 0, %s259
    %s274 = sphi 0, %s260
    %s278 = sphi 0, %s278
    %s280 = sphi 0, %s278
    %s281 = sphi 0, %s280
    %s295 = sphi 0, %s281
    %s299 = sphi 0, %s299
    %s301 = sphi 0, %s299
    %s302 = sphi 0, %s301
    %s316 = sphi 0, %s302
    %s320 = sphi 0, %s320
    %s322 = sphi 0, %s320
    %s323 = sphi 0, %s322
    %s337 = sphi 0, %s323
  $region4: #{tpu_custom_call.1} parent=0 // loop_header_branch
    %22 = sbr.rel (%p20) target = $region8
  $region5: #{tpu_custom_call.1} parent=0 // loop_body
    %s24 = ssub.s32 %s19, 1
    %s25 = ssub.s32 %s19, 2
    %s26 = sadd.s32 %s19, 1
    %s27 = ssub.s32 %s19, %s26
    %p28 = scmp.eq.s32.totalorder %s27, 0
    %s30 = sadd.s32 %s29, 1
    %s31 = scalar_select %p28, %s29, %s30
    %p34 = pneg %p28
    %p35 = scmp.eq.s32.totalorder %s19, 1
    %p36 = por %p34, %p35
    %p37 = scmp.ne.s32.totalorder %s29, %s32
    %p38 = scmp.eq.s32.totalorder %s19, 0
    %p39 = por %p37, %p38
    %p40 = scmp.ne.s32.totalorder %s29, %s32
    %p41 = scmp.eq.s32.totalorder %s24, 1
    %p42 = por %p40, %p41
    %p43 = scmp.ne.s32.totalorder %s32, %s33
    %p44 = scmp.eq.s32.totalorder %s24, 0
    %p45 = por %p43, %p44
    %p46 = scmp.ne.s32.totalorder %s32, %s33
    %p47 = scmp.eq.s32.totalorder %s25, 1
    %p48 = por %p46, %p47
    %p50 = scmp.ne.s32.totalorder %s33, %s49
    %p51 = scmp.eq.s32.totalorder %s25, 0
    %p52 = por %p50, %p51
    %s53 = ssub.s32 %s19, %s26
    %p54 = scmp.eq.s32.totalorder %s53, 0
    %s56 = sadd.s32 %s55, 1
    %s57 = scalar_select %p54, %s55, %s56
    %p60 = pneg %p54
    %p61 = scmp.eq.s32.totalorder %s19, 1
    %p62 = por %p60, %p61
    %p63 = scmp.ne.s32.totalorder %s55, %s58
    %p64 = scmp.eq.s32.totalorder %s19, 0
    %p65 = por %p63, %p64
    %p66 = scmp.ne.s32.totalorder %s55, %s58
    %p67 = scmp.eq.s32.totalorder %s24, 1
    %p68 = por %p66, %p67
    %p69 = scmp.ne.s32.totalorder %s58, %s59
    %p70 = scmp.eq.s32.totalorder %s24, 0
    %p71 = por %p69, %p70
    %p72 = scmp.ne.s32.totalorder %s58, %s59
    %p73 = scmp.eq.s32.totalorder %s25, 1
    %p74 = por %p72, %p73
    %p76 = scmp.ne.s32.totalorder %s59, %s75
    %p77 = scmp.eq.s32.totalorder %s25, 0
    %p78 = por %p76, %p77
    %s79 = ssub.s32 %s19, %s26
    %p80 = scmp.eq.s32.totalorder %s79, 0
    %s82 = sadd.s32 %s81, 1
    %s83 = scalar_select %p80, %s81, %s82
    %p86 = pneg %p80
    %p87 = scmp.eq.s32.totalorder %s19, 1
    %p88 = por %p86, %p87
    %p89 = scmp.ne.s32.totalorder %s81, %s84
    %p90 = scmp.eq.s32.totalorder %s19, 0
    %p91 = por %p89, %p90
    %p92 = scmp.ne.s32.totalorder %s81, %s84
    %p93 = scmp.eq.s32.totalorder %s24, 1
    %p94 = por %p92, %p93
    %p95 = scmp.ne.s32.totalorder %s84, %s85
    %p96 = scmp.eq.s32.totalorder %s24, 0
    %p97 = por %p95, %p96
    %p98 = scmp.ne.s32.totalorder %s84, %s85
    %p99 = scmp.eq.s32.totalorder %s25, 1
    %p100 = por %p98, %p99
    %p102 = scmp.ne.s32.totalorder %s85, %s101
    %p103 = scmp.eq.s32.totalorder %s25, 0
    %p104 = por %p102, %p103
    %s105 = ssub.s32 %s19, %s26
    %p106 = scmp.eq.s32.totalorder %s105, 0
    %s108 = sadd.s32 %s107, 1
    %s109 = scalar_select %p106, %s107, %s108
    %p112 = pneg %p106
    %p113 = scmp.eq.s32.totalorder %s19, 1
    %p114 = por %p112, %p113
    %p115 = scmp.ne.s32.totalorder %s107, %s110
    %p116 = scmp.eq.s32.totalorder %s19, 0
    %p117 = por %p115, %p116
    %p118 = scmp.ne.s32.totalorder %s107, %s110
    %p119 = scmp.eq.s32.totalorder %s24, 1
    %p120 = por %p118, %p119
    %p121 = scmp.ne.s32.totalorder %s110, %s111
    %p122 = scmp.eq.s32.totalorder %s24, 0
    %p123 = por %p121, %p122
    %p124 = scmp.ne.s32.totalorder %s110, %s111
    %p125 = scmp.eq.s32.totalorder %s25, 1
    %p126 = por %p124, %p125
    %p128 = scmp.ne.s32.totalorder %s111, %s127
    %p129 = scmp.eq.s32.totalorder %s25, 0
    %p130 = por %p128, %p129
    %s132 = sadd.s32 %s131, 1
    %p135 = scmp.eq.s32.totalorder %s19, 1
    %p136 = scmp.ne.s32.totalorder %s131, %s133
    %p137 = scmp.eq.s32.totalorder %s19, 0
    %p138 = por %p136, %p137
    %p139 = scmp.ne.s32.totalorder %s131, %s133
    %p140 = scmp.eq.s32.totalorder %s24, 1
    %p141 = por %p139, %p140
    %p142 = scmp.ne.s32.totalorder %s133, %s134
    %p143 = scmp.eq.s32.totalorder %s24, 0
    %p144 = por %p142, %p143
    %p145 = scmp.ne.s32.totalorder %s133, %s134
    %p146 = scmp.eq.s32.totalorder %s25, 1
    %p147 = por %p145, %p146
    %p149 = scmp.ne.s32.totalorder %s134, %s148
    %p150 = scmp.eq.s32.totalorder %s25, 0
    %p151 = por %p149, %p150
    %s153 = sadd.s32 %s152, 1
    %p156 = scmp.eq.s32.totalorder %s19, 1
    %p157 = scmp.ne.s32.totalorder %s152, %s154
    %p158 = scmp.eq.s32.totalorder %s19, 0
    %p159 = por %p157, %p158
    %p160 = scmp.ne.s32.totalorder %s152, %s154
    %p161 = scmp.eq.s32.totalorder %s24, 1
    %p162 = por %p160, %p161
    %p163 = scmp.ne.s32.totalorder %s154, %s155
    %p164 = scmp.eq.s32.totalorder %s24, 0
    %p165 = por %p163, %p164
    %p166 = scmp.ne.s32.totalorder %s154, %s155
    %p167 = scmp.eq.s32.totalorder %s25, 1
    %p168 = por %p166, %p167
    %p170 = scmp.ne.s32.totalorder %s155, %s169
    %p171 = scmp.eq.s32.totalorder %s25, 0
    %p172 = por %p170, %p171
    %s174 = sadd.s32 %s173, 1
    %p177 = scmp.eq.s32.totalorder %s19, 1
    %p178 = scmp.ne.s32.totalorder %s173, %s175
    %p179 = scmp.eq.s32.totalorder %s19, 0
    %p180 = por %p178, %p179
    %p181 = scmp.ne.s32.totalorder %s173, %s175
    %p182 = scmp.eq.s32.totalorder %s24, 1
    %p183 = por %p181, %p182
    %p184 = scmp.ne.s32.totalorder %s175, %s176
    %p185 = scmp.eq.s32.totalorder %s24, 0
    %p186 = por %p184, %p185
    %p187 = scmp.ne.s32.totalorder %s175, %s176
    %p188 = scmp.eq.s32.totalorder %s25, 1
    %p189 = por %p187, %p188
    %p191 = scmp.ne.s32.totalorder %s176, %s190
    %p192 = scmp.eq.s32.totalorder %s25, 0
    %p193 = por %p191, %p192
    %s195 = sadd.s32 %s194, 1
    %p198 = scmp.eq.s32.totalorder %s19, 1
    %p199 = scmp.ne.s32.totalorder %s194, %s196
    %p200 = scmp.eq.s32.totalorder %s19, 0
    %p201 = por %p199, %p200
    %p202 = scmp.ne.s32.totalorder %s194, %s196
    %p203 = scmp.eq.s32.totalorder %s24, 1
    %p204 = por %p202, %p203
    %p205 = scmp.ne.s32.totalorder %s196, %s197
    %p206 = scmp.eq.s32.totalorder %s24, 0
    %p207 = por %p205, %p206
    %p208 = scmp.ne.s32.totalorder %s196, %s197
    %p209 = scmp.eq.s32.totalorder %s25, 1
    %p210 = por %p208, %p209
    %p212 = scmp.ne.s32.totalorder %s197, %s211
    %p213 = scmp.eq.s32.totalorder %s25, 0
    %p214 = por %p212, %p213
    %s216 = sadd.s32 %s215, 1
    %p219 = scmp.eq.s32.totalorder %s19, 1
    %p220 = scmp.ne.s32.totalorder %s215, %s217
    %p221 = scmp.eq.s32.totalorder %s19, 0
    %p222 = por %p220, %p221
    %p223 = scmp.ne.s32.totalorder %s215, %s217
    %p224 = scmp.eq.s32.totalorder %s24, 1
    %p225 = por %p223, %p224
    %p226 = scmp.ne.s32.totalorder %s217, %s218
    %p227 = scmp.eq.s32.totalorder %s24, 0
    %p228 = por %p226, %p227
    %p229 = scmp.ne.s32.totalorder %s217, %s218
    %p230 = scmp.eq.s32.totalorder %s25, 1
    %p231 = por %p229, %p230
    %p233 = scmp.ne.s32.totalorder %s218, %s232
    %p234 = scmp.eq.s32.totalorder %s25, 0
    %p235 = por %p233, %p234
    %s237 = sadd.s32 %s236, 1
    %p240 = scmp.eq.s32.totalorder %s19, 1
    %p241 = scmp.ne.s32.totalorder %s236, %s238
    %p242 = scmp.eq.s32.totalorder %s19, 0
    %p243 = por %p241, %p242
    %p244 = scmp.ne.s32.totalorder %s236, %s238
    %p245 = scmp.eq.s32.totalorder %s24, 1
    %p246 = por %p244, %p245
    %p247 = scmp.ne.s32.totalorder %s238, %s239
    %p248 = scmp.eq.s32.totalorder %s24, 0
    %p249 = por %p247, %p248
    %p250 = scmp.ne.s32.totalorder %s238, %s239
    %p251 = scmp.eq.s32.totalorder %s25, 1
    %p252 = por %p250, %p251
    %p254 = scmp.ne.s32.totalorder %s239, %s253
    %p255 = scmp.eq.s32.totalorder %s25, 0
    %p256 = por %p254, %p255
    %s258 = sadd.s32 %s257, 1
    %p261 = scmp.eq.s32.totalorder %s19, 1
    %p262 = scmp.ne.s32.totalorder %s257, %s259
    %p263 = scmp.eq.s32.totalorder %s19, 0
    %p264 = por %p262, %p263
    %p265 = scmp.ne.s32.totalorder %s257, %s259
    %p266 = scmp.eq.s32.totalorder %s24, 1
    %p267 = por %p265, %p266
    %p268 = scmp.ne.s32.totalorder %s259, %s260
    %p269 = scmp.eq.s32.totalorder %s24, 0
    %p270 = por %p268, %p269
    %p271 = scmp.ne.s32.totalorder %s259, %s260
    %p272 = scmp.eq.s32.totalorder %s25, 1
    %p273 = por %p271, %p272
    %p275 = scmp.ne.s32.totalorder %s260, %s274
    %p276 = scmp.eq.s32.totalorder %s25, 0
    %p277 = por %p275, %p276
    %s279 = sadd.s32 %s278, 1
    %p282 = scmp.eq.s32.totalorder %s19, 1
    %p283 = scmp.ne.s32.totalorder %s278, %s280
    %p284 = scmp.eq.s32.totalorder %s19, 0
    %p285 = por %p283, %p284
    %p286 = scmp.ne.s32.totalorder %s278, %s280
    %p287 = scmp.eq.s32.totalorder %s24, 1
    %p288 = por %p286, %p287
    %p289 = scmp.ne.s32.totalorder %s280, %s281
    %p290 = scmp.eq.s32.totalorder %s24, 0
    %p291 = por %p289, %p290
    %p292 = scmp.ne.s32.totalorder %s280, %s281
    %p293 = scmp.eq.s32.totalorder %s25, 1
    %p294 = por %p292, %p293
    %p296 = scmp.ne.s32.totalorder %s281, %s295
    %p297 = scmp.eq.s32.totalorder %s25, 0
    %p298 = por %p296, %p297
    %s300 = sadd.s32 %s299, 1
    %p303 = scmp.eq.s32.totalorder %s19, 1
    %p304 = scmp.ne.s32.totalorder %s299, %s301
    %p305 = scmp.eq.s32.totalorder %s19, 0
    %p306 = por %p304, %p305
    %p307 = scmp.ne.s32.totalorder %s299, %s301
    %p308 = scmp.eq.s32.totalorder %s24, 1
    %p309 = por %p307, %p308
    %p310 = scmp.ne.s32.totalorder %s301, %s302
    %p311 = scmp.eq.s32.totalorder %s24, 0
    %p312 = por %p310, %p311
    %p313 = scmp.ne.s32.totalorder %s301, %s302
    %p314 = scmp.eq.s32.totalorder %s25, 1
    %p315 = por %p313, %p314
    %p317 = scmp.ne.s32.totalorder %s302, %s316
    %p318 = scmp.eq.s32.totalorder %s25, 0
    %p319 = por %p317, %p318
    %s321 = sadd.s32 %s320, 1
    %p324 = scmp.eq.s32.totalorder %s19, 1
    %p325 = scmp.ne.s32.totalorder %s320, %s322
    %p326 = scmp.eq.s32.totalorder %s19, 0
    %p327 = por %p325, %p326
    %p328 = scmp.ne.s32.totalorder %s320, %s322
    %p329 = scmp.eq.s32.totalorder %s24, 1
    %p330 = por %p328, %p329
    %p331 = scmp.ne.s32.totalorder %s322, %s323
    %p332 = scmp.eq.s32.totalorder %s24, 0
    %p333 = por %p331, %p332
    %p334 = scmp.ne.s32.totalorder %s322, %s323
    %p335 = scmp.eq.s32.totalorder %s25, 1
    %p336 = por %p334, %p335
    %p338 = scmp.ne.s32.totalorder %s323, %s337
    %p339 = scmp.eq.s32.totalorder %s25, 0
    %p340 = por %p338, %p339
    %p341 = scmp.le.s32.totalorder 1, %s19
    %p342 = scmp.lt.s32.totalorder %s19, 3
    %p343 = pnand %p341, %p342
    %p344 = pneg %p343
    // Predicated region
    $region9: #{tpu_custom_call.1} parent=5 // pred_check
      _
    $region10: #{tpu_custom_call.1} parent=5 // pred_check_branch
      %346 = sbr.rel (%p343) target = $region12
    $region11: #{tpu_custom_call.1} parent=5 // pred_region
      %s347 = ssub.s32 %s19, 1
      // Predicated region
      $region13: #{tpu_custom_call.1} parent=11 // pred_check
        %p348 = pneg %p144
      $region14: #{tpu_custom_call.1} parent=11 // pred_check_branch
        %350 = sbr.rel (%p348) target = $region16
      $region15: #{tpu_custom_call.1} parent=11 // pred_region
        _
      $region16: #{tpu_custom_call.1} parent=11 // pred_fallthru
        _
      // Predicated region
      $region17: #{tpu_custom_call.1} parent=11 // pred_check
        %p351 = pneg %p165
      $region18: #{tpu_custom_call.1} parent=11 // pred_check_branch
        %353 = sbr.rel (%p351) target = $region20
      $region19: #{tpu_custom_call.1} parent=11 // pred_region
        _
      $region20: #{tpu_custom_call.1} parent=11 // pred_fallthru
        _
      // Predicated region
      $region21: #{tpu_custom_call.1} parent=11 // pred_check
        %p354 = pneg %p186
      $region22: #{tpu_custom_call.1} parent=11 // pred_check_branch
        %356 = sbr.rel (%p354) target = $region24
      $region23: #{tpu_custom_call.1} parent=11 // pred_region
        _
      $region24: #{tpu_custom_call.1} parent=11 // pred_fallthru
        _
      // Predicated region
      $region25: #{tpu_custom_call.1} parent=11 // pred_check
        %p357 = pneg %p207
      $region26: #{tpu_custom_call.1} parent=11 // pred_check_branch
        %359 = sbr.rel (%p357) target = $region28
      $region27: #{tpu_custom_call.1} parent=11 // pred_region
        _
      $region28: #{tpu_custom_call.1} parent=11 // pred_fallthru
        _
      // Predicated region
      $region29: #{tpu_custom_call.1} parent=11 // pred_check
        %p360 = pneg %p228
      $region30: #{tpu_custom_call.1} parent=11 // pred_check_branch
        %362 = sbr.rel (%p360) target = $region32
      $region31: #{tpu_custom_call.1} parent=11 // pred_region
        _
      $region32: #{tpu_custom_call.1} parent=11 // pred_fallthru
        _
      // Predicated region
      $region33: #{tpu_custom_call.1} parent=11 // pred_check
        %p363 = pneg %p249
      $region34: #{tpu_custom_call.1} parent=11 // pred_check_branch
        %365 = sbr.rel (%p363) target = $region36
      $region35: #{tpu_custom_call.1} parent=11 // pred_region
        _
      $region36: #{tpu_custom_call.1} parent=11 // pred_fallthru
        _
      // Predicated region
      $region37: #{tpu_custom_call.1} parent=11 // pred_check
        %p366 = pneg %p270
      $region38: #{tpu_custom_call.1} parent=11 // pred_check_branch
        %368 = sbr.rel (%p366) target = $region40
      $region39: #{tpu_custom_call.1} parent=11 // pred_region
        _
      $region40: #{tpu_custom_call.1} parent=11 // pred_fallthru
        _
      // Predicated region
      $region41: #{tpu_custom_call.1} parent=11 // pred_check
        %p369 = pneg %p291
      $region42: #{tpu_custom_call.1} parent=11 // pred_check_branch
        %371 = sbr.rel (%p369) target = $region44
      $region43: #{tpu_custom_call.1} parent=11 // pred_region
        _
      $region44: #{tpu_custom_call.1} parent=11 // pred_fallthru
        _
      // Predicated region
      $region45: #{tpu_custom_call.1} parent=11 // pred_check
        %p372 = pneg %p312
      $region46: #{tpu_custom_call.1} parent=11 // pred_check_branch
        %374 = sbr.rel (%p372) target = $region48
      $region47: #{tpu_custom_call.1} parent=11 // pred_region
        _
      $region48: #{tpu_custom_call.1} parent=11 // pred_fallthru
        _
    $region12: #{tpu_custom_call.1} parent=5 // pred_fallthru
      _
    %p375 = scmp.lt.s32.totalorder %s19, 2
    // Predicated region
    $region49: #{tpu_custom_call.1} parent=5 // pred_check
      %p376 = pneg %p375
    $region50: #{tpu_custom_call.1} parent=5 // pred_check_branch
      %378 = sbr.rel (%p376) target = $region52
    $region51: #{tpu_custom_call.1} parent=5 // pred_region
      // Predicated region
      $region53: #{tpu_custom_call.1} parent=51 // pred_check
        %p379 = pneg %p39
      $region54: #{tpu_custom_call.1} parent=51 // pred_check_branch
        %381 = sbr.rel (%p379) target = $region56
      $region55: #{tpu_custom_call.1} parent=51 // pred_region
        %s382 = smul.u32 16, %s19
        %p383 = scmp.lt.s32.totalorder %s382, 31
        %s384 = scalar_select %p383, %s382, 31
        %s385 = smul.addr %s384, 8
        %s386 = scalar_lea.vmem %s0, %s385
        %s387 = smul.u32 16, %s19
      $region56: #{tpu_custom_call.1} parent=51 // pred_fallthru
        _
      // Predicated region
      $region57: #{tpu_custom_call.1} parent=51 // pred_check
        %p388 = pneg %p65
      $region58: #{tpu_custom_call.1} parent=51 // pred_check_branch
        %390 = sbr.rel (%p388) target = $region60
      $region59: #{tpu_custom_call.1} parent=51 // pred_region
        %s391 = smul.u32 16, %s19
        %p392 = scmp.lt.s32.totalorder %s391, 31
        %s393 = scalar_select %p392, %s391, 31
        %s394 = smul.addr %s393, 8
        %s395 = scalar_lea.vmem %s1, %s394
        %s396 = smul.u32 16, %s19
      $region60: #{tpu_custom_call.1} parent=51 // pred_fallthru
        _
      // Predicated region
      $region61: #{tpu_custom_call.1} parent=51 // pred_check
        %p397 = pneg %p91
      $region62: #{tpu_custom_call.1} parent=51 // pred_check_branch
        %399 = sbr.rel (%p397) target = $region64
      $region63: #{tpu_custom_call.1} parent=51 // pred_region
        %p400 = scmp.lt.s32.totalorder %s19, 1
        %s401 = scalar_select %p400, %s19, 1
        %s402 = scalar_lea.vmem %s2, %s401
      $region64: #{tpu_custom_call.1} parent=51 // pred_fallthru
        _
      // Predicated region
      $region65: #{tpu_custom_call.1} parent=51 // pred_check
        %p403 = pneg %p117
      $region66: #{tpu_custom_call.1} parent=51 // pred_check_branch
        %405 = sbr.rel (%p403) target = $region68
      $region67: #{tpu_custom_call.1} parent=51 // pred_region
        %s406 = smul.u32 16, %s19
        %p407 = scmp.lt.s32.totalorder %s406, 31
        %s408 = scalar_select %p407, %s406, 31
        %s409 = smul.addr %s408, 8
        %s410 = scalar_lea.vmem %s3, %s409
        %s411 = smul.u32 16, %s19
      $region68: #{tpu_custom_call.1} parent=51 // pred_fallthru
        _
    $region52: #{tpu_custom_call.1} parent=5 // pred_fallthru
      _
    %p412 = scmp.le.s32.totalorder 1, %s19
    %p413 = scmp.lt.s32.totalorder %s19, 3
    %p414 = pnand %p412, %p413
    %p415 = pneg %p414
    // Predicated region
    $region69: #{tpu_custom_call.1} parent=5 // pred_check
      _
    $region70: #{tpu_custom_call.1} parent=5 // pred_check_branch
      %417 = sbr.rel (%p414) target = $region72
    $region71: #{tpu_custom_call.1} parent=5 // pred_region
      %s418 = ssub.s32 %s19, 1
      %s419 = smul.u32 16, %s24
      %p420 = scmp.lt.s32.totalorder %s419, 31
      %s421 = scalar_select %p420, %s419, 31
      %s422 = smul.addr %s421, 8
      %s423 = scalar_lea.vmem %s0, %s422
      %p424 = pneg %p45
      %p425 = pneg %p42
      %s426 = smul.u32 16, %s24
      %p427 = scmp.lt.s32.totalorder %s426, 31
      %s428 = scalar_select %p427, %s426, 31
      %s429 = smul.addr %s428, 8
      %s430 = scalar_lea.vmem %s1, %s429
      %p431 = pneg %p71
      %p432 = pneg %p68
      %p433 = scmp.lt.s32.totalorder %s24, 1
      %s434 = scalar_select %p433, %s24, 1
      %s435 = scalar_lea.vmem %s2, %s434
      %p436 = pneg %p97
      %p437 = pneg %p94
      %s438 = smul.u32 16, %s24
      %p439 = scmp.lt.s32.totalorder %s438, 31
      %s440 = scalar_select %p439, %s438, 31
      %s441 = smul.addr %s440, 8
      %s442 = scalar_lea.vmem %s3, %s441
      %p443 = pneg %p123
      %p444 = pneg %p120
      %p445 = pneg %p144
      %p446 = pneg %p141
      %p447 = pneg %p165
      %p448 = pneg %p162
      %p449 = pneg %p186
      %p450 = pneg %p183
      %p451 = pneg %p207
      %p452 = pneg %p204
      %p453 = pneg %p228
      %p454 = pneg %p225
      %p455 = pneg %p249
      %p456 = pneg %p246
      %p457 = pneg %p270
      %p458 = pneg %p267
      %p459 = pneg %p291
      %p460 = pneg %p288
      %p461 = pneg %p312
      %p462 = pneg %p309
      %p463 = pneg %p333
      %p464 = pneg %p330
      %s465 = smul.u32 16, %s24
      %p466 = scmp.lt.s32.totalorder %s465, 31
      %s467 = scalar_select %p466, %s465, 31
      %s468 = smul.addr %s467, 8
      %s469 = scalar_lea.vmem %s0, %s468
      %s470 = smul.u32 16, %s24
      %s471 = smul.u32 16, %s24
      %p472 = scmp.lt.s32.totalorder %s471, 31
      %s473 = scalar_select %p472, %s471, 31
      %s474 = smul.addr %s473, 8
      %s475 = scalar_lea.vmem %s1, %s474
      %s476 = smul.u32 16, %s24
      %p477 = scmp.lt.s32.totalorder %s24, 1
      %s478 = scalar_select %p477, %s24, 1
      %s479 = scalar_lea.vmem %s2, %s478
      %s480 = smul.u32 16, %s24
      %p481 = scmp.lt.s32.totalorder %s480, 31
      %s482 = scalar_select %p481, %s480, 31
      %s483 = smul.addr %s482, 8
      %s484 = scalar_lea.vmem %s3, %s483
      %s485 = smul.u32 16, %s24
      %p486 = scmp.eq.s32.totalorder %s24, 0
      // Predicated region
      $region73: #{tpu_custom_call.1} parent=71 // pred_check
        %p487 = pneg %p486
      $region74: #{tpu_custom_call.1} parent=71 // pred_check_branch
        %489 = sbr.rel (%p487) target = $region76
      $region75: #{tpu_custom_call.1} parent=71 // pred_region
        %v490 = vld [vmem:[%s4] sm:$0xff]
        %v491 = vld [vmem:[%s4 + $0x8] sm:$0xff]
        %v492 = vld [vmem:[%s4 + $0x10] sm:$0xff]
        %v493 = vld [vmem:[%s4 + $0x18] sm:$0xff]
        %v494 = vld [vmem:[%s4 + $0x20] sm:$0xff]
        %v495 = vld [vmem:[%s4 + $0x28] sm:$0xff]
        %v496 = vld [vmem:[%s4 + $0x30] sm:$0xff]
        %v497 = vld [vmem:[%s4 + $0x38] sm:$0xff]
        %v498 = vld [vmem:[%s5] sm:$0xff]
        %v499 = vld [vmem:[%s6] sm:$0x1]
        %v501 = vlaneseq
        %v502 = vshrl.u32 %v501, 7
        %v503 = vsub.s32 0, %v502
        %v504 = vrot.slane %v499, %v503
        %vm506 = vcmask 64512
        %v508 = vsel %vm506, %v490, 0
        %v511 = vsel %vm506, %v491, 0
        %v514 = vsel %vm506, %v492, 0
        %v517 = vsel %vm506, %v493, 0
        %v520 = vsel %vm506, %v494, 0
        %v523 = vsel %vm506, %v495, 0
        %v526 = vsel %vm506, %v496, 0
        %v529 = vsel %vm506, %v497, 0
        %531 = vmatprep.subr.mxu0 0.0
        %532 = vmatpush1.msra.mxu0 %v498
        %533 = vmatprep.subr.mxu0 0.0
        %534 = vmatpush1.msra.mxu0 0.0
        %535 = vmatprep.subr.mxu0 0.0
        %536 = vmatpush1.msra.mxu0 0.0
        %537 = vmatprep.subr.mxu0 0.0
        %538 = vmatpush1.msra.mxu0 0.0
        %539 = vmatprep.subr.mxu0 0.0
        %540 = vmatpush1.msra.mxu0 0.0
        %541 = vmatprep.subr.mxu0 0.0
        %542 = vmatpush1.msra.mxu0 0.0
        %543 = vmatprep.subr.mxu0 0.0
        %544 = vmatpush1.msra.mxu0 0.0
        %545 = vmatprep.subr.mxu0 0.0
        %546 = vmatpush1.msra.mxu0 0.0
        %547 = vmatprep.subr.mxu0 0.0
        %548 = vmatpush1.msra.mxu0 0.0
        %549 = vmatprep.subr.mxu0 0.0
        %550 = vmatpush1.msra.mxu0 0.0
        %551 = vmatprep.subr.mxu0 0.0
        %552 = vmatpush1.msra.mxu0 0.0
        %553 = vmatprep.subr.mxu0 0.0
        %554 = vmatpush1.msra.mxu0 0.0
        %555 = vmatprep.subr.mxu0 0.0
        %556 = vmatpush1.msra.mxu0 0.0
        %557 = vmatprep.subr.mxu0 0.0
        %558 = vmatpush1.msra.mxu0 0.0
        %559 = vmatprep.subr.mxu0 0.0
        %560 = vmatpush1.msra.mxu0 0.0
        %561 = vmatprep.subr.mxu0 0.0
        %562 = vmatpush1.msra.mxu0 0.0
        %563 = vmatprep.subr.mxu0 0.0
        %564 = vmatpush1.msra.mxu0 0.0
        %565 = vmatprep.subr.mxu0 0.0
        %566 = vmatpush1.msra.mxu0 0.0
        %567 = vmatprep.subr.mxu0 0.0
        %568 = vmatpush1.msra.mxu0 0.0
        %569 = vmatprep.subr.mxu0 0.0
        %570 = vmatpush1.msra.mxu0 0.0
        %571 = vmatprep.subr.mxu0 0.0
        %572 = vmatpush1.msra.mxu0 0.0
        %573 = vmatprep.subr.mxu0 0.0
        %574 = vmatpush1.msra.mxu0 0.0
        %575 = vmatprep.subr.mxu0 0.0
        %576 = vmatpush1.msra.mxu0 0.0
        %577 = vmatprep.subr.mxu0 0.0
        %578 = vmatpush1.msra.mxu0 0.0
        %579 = vmatprep.subr.mxu0 0.0
        %580 = vmatpush1.msra.mxu0 0.0
        %581 = vmatprep.subr.mxu0 0.0
        %582 = vmatpush1.msra.mxu0 0.0
        %583 = vmatprep.subr.mxu0 0.0
        %584 = vmatpush1.msra.mxu0 0.0
        %585 = vmatprep.subr.mxu0 0.0
        %586 = vmatpush1.msra.mxu0 0.0
        %587 = vmatprep.subr.mxu0 0.0
        %588 = vmatpush1.msra.mxu0 0.0
        %589 = vmatprep.subr.mxu0 0.0
        %590 = vmatpush1.msra.mxu0 0.0
        %591 = vmatprep.subr.mxu0 0.0
        %592 = vmatpush1.msra.mxu0 0.0
        %593 = vmatprep.subr.mxu0 0.0
        %594 = vmatpush1.msra.mxu0 0.0
        %595 = vmatprep.mubr.f32.mxu0 0.0
        %596 = vmatmul.mubr.f32.gmra.mrb[0].mxu0 %v508
        %v597 = vpop.f32.mrb[0].mxu0
        %v598 = vadd.f32 %v504, %v597
        %v599 = vpop.f32.mrb[0].mxu0
        %600 = vmatprep.mubr.f32.mxu0 0.0
        %601 = vmatmul.mubr.f32.gmra.mrb[0].mxu0 %v511
        %v602 = vpop.f32.mrb[0].mxu0
        %v603 = vadd.f32 %v504, %v602
        %v604 = vpop.f32.mrb[0].mxu0
        %605 = vmatprep.mubr.f32.mxu0 0.0
        %606 = vmatmul.mubr.f32.gmra.mrb[0].mxu0 %v514
        %v607 = vpop.f32.mrb[0].mxu0
        %v608 = vadd.f32 %v504, %v607
        %v609 = vpop.f32.mrb[0].mxu0
        %610 = vmatprep.mubr.f32.mxu0 0.0
        %611 = vmatmul.mubr.f32.gmra.mrb[0].mxu0 %v517
        %v612 = vpop.f32.mrb[0].mxu0
        %v613 = vadd.f32 %v504, %v612
        %v614 = vpop.f32.mrb[0].mxu0
        %615 = vmatprep.mubr.f32.mxu0 0.0
        %616 = vmatmul.mubr.f32.gmra.mrb[0].mxu0 %v520
        %v617 = vpop.f32.mrb[0].mxu0
        %v618 = vadd.f32 %v504, %v617
        %v619 = vpop.f32.mrb[0].mxu0
        %620 = vmatprep.mubr.f32.mxu0 0.0
        %621 = vmatmul.mubr.f32.gmra.mrb[0].mxu0 %v523
        %v622 = vpop.f32.mrb[0].mxu0
        %v623 = vadd.f32 %v504, %v622
        %v624 = vpop.f32.mrb[0].mxu0
        %625 = vmatprep.mubr.f32.mxu0 0.0
        %626 = vmatmul.mubr.f32.gmra.mrb[0].mxu0 %v526
        %v627 = vpop.f32.mrb[0].mxu0
        %v628 = vadd.f32 %v504, %v627
        %v629 = vpop.f32.mrb[0].mxu0
        %630 = vmatprep.mubr.f32.mxu0 0.0
        %631 = vmatmul.mubr.f32.gmra.mrb[0].mxu0 %v529
        %v632 = vpop.f32.mrb[0].mxu0
        %v633 = vadd.f32 %v504, %v632
        %v634 = vpop.f32.mrb[0].mxu0
        %635 = vdwg.mxu0
        %v636 = vmax.f32 %v598, 0.0
        %v637 = vmax.f32 %v603, 0.0
        %v638 = vmax.f32 %v608, 0.0
        %v639 = vmax.f32 %v613, 0.0
        %v640 = vmax.f32 %v618, 0.0
        %v641 = vmax.f32 %v623, 0.0
        %v642 = vmax.f32 %v628, 0.0
        %v643 = vmax.f32 %v633, 0.0
        %vm644 = vcmask 261120
        %645 = vst.msk [vmem:[#allocation2] sm:$0xff] %vm644, %v636
        %646 = vst.msk [vmem:[#allocation2 + $0x8] sm:$0xff] %vm644, %v637
        %647 = vst.msk [vmem:[#allocation2 + $0x10] sm:$0xff] %vm644, %v638
        %648 = vst.msk [vmem:[#allocation2 + $0x18] sm:$0xff] %vm644, %v639
        %649 = vst.msk [vmem:[#allocation2 + $0x20] sm:$0xff] %vm644, %v640
        %650 = vst.msk [vmem:[#allocation2 + $0x28] sm:$0xff] %vm644, %v641
        %651 = vst.msk [vmem:[#allocation2 + $0x30] sm:$0xff] %vm644, %v642
        %652 = vst.msk [vmem:[#allocation2 + $0x38] sm:$0xff] %vm644, %v643
        %653 = vst.msk [vmem:[#allocation3] sm:$0xff] %vm644, 0.0
        %654 = vst.msk [vmem:[#allocation3 + $0x8] sm:$0xff] %vm644, 0.0
        %655 = vst.msk [vmem:[#allocation3 + $0x10] sm:$0xff] %vm644, 0.0
        %656 = vst.msk [vmem:[#allocation3 + $0x18] sm:$0xff] %vm644, 0.0
        %657 = vst.msk [vmem:[#allocation3 + $0x20] sm:$0xff] %vm644, 0.0
        %658 = vst.msk [vmem:[#allocation3 + $0x28] sm:$0xff] %vm644, 0.0
        %659 = vst.msk [vmem:[#allocation3 + $0x30] sm:$0xff] %vm644, 0.0
        %660 = vst.msk [vmem:[#allocation3 + $0x38] sm:$0xff] %vm644, 0.0
      $region76: #{tpu_custom_call.1} parent=71 // pred_fallthru
        _
      %v661 = vld [vmem:[#allocation2] sm:$0xff]
      %v662 = vld [vmem:[#allocation2 + $0x8] sm:$0xff]
      %v663 = vld [vmem:[#allocation2 + $0x10] sm:$0xff]
      %v664 = vld [vmem:[#allocation2 + $0x18] sm:$0xff]
      %v665 = vld [vmem:[#allocation2 + $0x20] sm:$0xff]
      %v666 = vld [vmem:[#allocation2 + $0x28] sm:$0xff]
      %v667 = vld [vmem:[#allocation2 + $0x30] sm:$0xff]
      %v668 = vld [vmem:[#allocation2 + $0x38] sm:$0xff]
      %v669 = vld [vmem:[%s469] sm:$0xff]
      %v670 = vld [vmem:[%s469 + $0x8] sm:$0xff]
      %v671 = vld [vmem:[%s469 + $0x10] sm:$0xff]
      %v672 = vld [vmem:[%s469 + $0x18] sm:$0xff]
      %v673 = vld [vmem:[%s469 + $0x20] sm:$0xff]
      %v674 = vld [vmem:[%s469 + $0x28] sm:$0xff]
      %v675 = vld [vmem:[%s469 + $0x30] sm:$0xff]
      %v676 = vld [vmem:[%s469 + $0x38] sm:$0xff]
      %v677 = vld [vmem:[%s469 + $0x40] sm:$0xff]
      %v678 = vld [vmem:[%s469 + $0x48] sm:$0xff]
      %v679 = vld [vmem:[%s469 + $0x50] sm:$0xff]
      %v680 = vld [vmem:[%s469 + $0x58] sm:$0xff]
      %v681 = vld [vmem:[%s469 + $0x60] sm:$0xff]
      %v682 = vld [vmem:[%s469 + $0x68] sm:$0xff]
      %v683 = vld [vmem:[%s469 + $0x70] sm:$0xff]
      %v684 = vld [vmem:[%s469 + $0x78] sm:$0xff]
      %v685 = vld [vmem:[%s475] sm:$0xff]
      %v686 = vld [vmem:[%s475 + $0x8] sm:$0xff]
      %v687 = vld [vmem:[%s475 + $0x10] sm:$0xff]
      %v688 = vld [vmem:[%s475 + $0x18] sm:$0xff]
      %v689 = vld [vmem:[%s475 + $0x20] sm:$0xff]
      %v690 = vld [vmem:[%s475 + $0x28] sm:$0xff]
      %v691 = vld [vmem:[%s475 + $0x30] sm:$0xff]
      %v692 = vld [vmem:[%s475 + $0x38] sm:$0xff]
      %v693 = vld [vmem:[%s475 + $0x40] sm:$0xff]
      %v694 = vld [vmem:[%s475 + $0x48] sm:$0xff]
      %v695 = vld [vmem:[%s475 + $0x50] sm:$0xff]
      %v696 = vld [vmem:[%s475 + $0x58] sm:$0xff]
      %v697 = vld [vmem:[%s475 + $0x60] sm:$0xff]
      %v698 = vld [vmem:[%s475 + $0x68] sm:$0xff]
      %v699 = vld [vmem:[%s475 + $0x70] sm:$0xff]
      %v700 = vld [vmem:[%s475 + $0x78] sm:$0xff]
      %v701 = vlaneseq
      %v702 = vand.u32 %v701, 127
      %703 = vset.pattern.permute.xlu0 0
      %704 = vperm.xlu0 %703, %v669
      %v705 = vpop.permute.xlu0 %704
      %706 = vset.pattern.permute.xlu0 0
      %707 = vperm.xlu0 %706, %v670
      %v708 = vpop.permute.xlu0 %707
      %709 = vset.pattern.permute.xlu0 0
      %710 = vperm.xlu0 %709, %v671
      %v711 = vpop.permute.xlu0 %710
      %712 = vset.pattern.permute.xlu0 0
      %713 = vperm.xlu0 %712, %v672
      %v714 = vpop.permute.xlu0 %713
      %715 = vset.pattern.permute.xlu0 0
      %716 = vperm.xlu0 %715, %v673
      %v717 = vpop.permute.xlu0 %716
      %718 = vset.pattern.permute.xlu0 0
      %719 = vperm.xlu0 %718, %v674
      %v720 = vpop.permute.xlu0 %719
      %721 = vset.pattern.permute.xlu0 0
      %722 = vperm.xlu0 %721, %v675
      %v723 = vpop.permute.xlu0 %722
      %724 = vset.pattern.permute.xlu0 0
      %725 = vperm.xlu0 %724, %v676
      %v726 = vpop.permute.xlu0 %725
      %727 = vset.pattern.permute.xlu0 0
      %728 = vperm.xlu0 %727, %v677
      %v729 = vpop.permute.xlu0 %728
      %730 = vset.pattern.permute.xlu0 0
      %731 = vperm.xlu0 %730, %v678
      %v732 = vpop.permute.xlu0 %731
      %733 = vset.pattern.permute.xlu0 0
      %734 = vperm.xlu0 %733, %v679
      %v735 = vpop.permute.xlu0 %734
      %736 = vset.pattern.permute.xlu0 0
      %737 = vperm.xlu0 %736, %v680
      %v738 = vpop.permute.xlu0 %737
      %739 = vset.pattern.permute.xlu0 0
      %740 = vperm.xlu0 %739, %v681
      %v741 = vpop.permute.xlu0 %740
      %742 = vset.pattern.permute.xlu0 0
      %743 = vperm.xlu0 %742, %v682
      %v744 = vpop.permute.xlu0 %743
      %745 = vset.pattern.permute.xlu0 0
      %746 = vperm.xlu0 %745, %v683
      %v747 = vpop.permute.xlu0 %746
      %748 = vset.pattern.permute.xlu0 0
      %749 = vperm.xlu0 %748, %v684
      %v750 = vpop.permute.xlu0 %749
      %751 = vset.pattern.permute.xlu0 0
      %752 = vperm.xlu0 %751, %v685
      %v753 = vpop.permute.xlu0 %752
      %754 = vset.pattern.permute.xlu0 0
      %755 = vperm.xlu0 %754, %v686
      %v756 = vpop.permute.xlu0 %755
      %757 = vset.pattern.permute.xlu0 0
      %758 = vperm.xlu0 %757, %v687
      %v759 = vpop.permute.xlu0 %758
      %760 = vset.pattern.permute.xlu0 0
      %761 = vperm.xlu0 %760, %v688
      %v762 = vpop.permute.xlu0 %761
      %763 = vset.pattern.permute.xlu0 0
      %764 = vperm.xlu0 %763, %v689
      %v765 = vpop.permute.xlu0 %764
      %766 = vset.pattern.permute.xlu0 0
      %767 = vperm.xlu0 %766, %v690
      %v768 = vpop.permute.xlu0 %767
      %769 = vset.pattern.permute.xlu0 0
      %770 = vperm.xlu0 %769, %v691
      %v771 = vpop.permute.xlu0 %770
      %772 = vset.pattern.permute.xlu0 0
      %773 = vperm.xlu0 %772, %v692
      %v774 = vpop.permute.xlu0 %773
      %775 = vset.pattern.permute.xlu0 0
      %776 = vperm.xlu0 %775, %v693
      %v777 = vpop.permute.xlu0 %776
      %778 = vset.pattern.permute.xlu0 0
      %779 = vperm.xlu0 %778, %v694
      %v780 = vpop.permute.xlu0 %779
      %781 = vset.pattern.permute.xlu0 0
      %782 = vperm.xlu0 %781, %v695
      %v783 = vpop.permute.xlu0 %782
      %784 = vset.pattern.permute.xlu0 0
      %785 = vperm.xlu0 %784, %v696
      %v786 = vpop.permute.xlu0 %785
      %787 = vset.pattern.permute.xlu0 0
      %788 = vperm.xlu0 %787, %v697
      %v789 = vpop.permute.xlu0 %788
      %790 = vset.pattern.permute.xlu0 0
      %791 = vperm.xlu0 %790, %v698
      %v792 = vpop.permute.xlu0 %791
      %793 = vset.pattern.permute.xlu0 0
      %794 = vperm.xlu0 %793, %v699
      %v795 = vpop.permute.xlu0 %794
      %796 = vset.pattern.permute.xlu0 0
      %797 = vperm.xlu0 %796, %v700
      %v798 = vpop.permute.xlu0 %797
      %vm799 = vcmp.eq.s32.totalorder %v702, %v705
      %vm800 = vcmp.eq.s32.totalorder %v702, %v708
      %vm801 = vcmp.eq.s32.totalorder %v702, %v711
      %vm802 = vcmp.eq.s32.totalorder %v702, %v714
      %vm803 = vcmp.eq.s32.totalorder %v702, %v717
      %vm804 = vcmp.eq.s32.totalorder %v702, %v720
      %vm805 = vcmp.eq.s32.totalorder %v702, %v723
      %vm806 = vcmp.eq.s32.totalorder %v702, %v726
      %vm807 = vcmp.eq.s32.totalorder %v702, %v729
      %vm808 = vcmp.eq.s32.totalorder %v702, %v732
      %vm809 = vcmp.eq.s32.totalorder %v702, %v735
      %vm810 = vcmp.eq.s32.totalorder %v702, %v738
      %vm811 = vcmp.eq.s32.totalorder %v702, %v741
      %vm812 = vcmp.eq.s32.totalorder %v702, %v744
      %vm813 = vcmp.eq.s32.totalorder %v702, %v747
      %vm814 = vcmp.eq.s32.totalorder %v702, %v750
      %vm815 = vcmp.eq.s32.totalorder %v702, %v753
      %vm816 = vcmp.eq.s32.totalorder %v702, %v756
      %vm817 = vcmp.eq.s32.totalorder %v702, %v759
      %vm818 = vcmp.eq.s32.totalorder %v702, %v762
      %vm819 = vcmp.eq.s32.totalorder %v702, %v765
      %vm820 = vcmp.eq.s32.totalorder %v702, %v768
      %vm821 = vcmp.eq.s32.totalorder %v702, %v771
      %vm822 = vcmp.eq.s32.totalorder %v702, %v774
      %vm823 = vcmp.eq.s32.totalorder %v702, %v777
      %vm824 = vcmp.eq.s32.totalorder %v702, %v780
      %vm825 = vcmp.eq.s32.totalorder %v702, %v783
      %vm826 = vcmp.eq.s32.totalorder %v702, %v786
      %vm827 = vcmp.eq.s32.totalorder %v702, %v789
      %vm828 = vcmp.eq.s32.totalorder %v702, %v792
      %vm829 = vcmp.eq.s32.totalorder %v702, %v795
      %vm830 = vcmp.eq.s32.totalorder %v702, %v798
      %v831 = vsel %vm799, 1, 0
      %v832 = vsel %vm800, 1, 0
      %v833 = vsel %vm801, 1, 0
      %v834 = vsel %vm802, 1, 0
      %v835 = vsel %vm803, 1, 0
      %v836 = vsel %vm804, 1, 0
      %v837 = vsel %vm805, 1, 0
      %v838 = vsel %vm806, 1, 0
      %v839 = vsel %vm807, 1, 0
      %v840 = vsel %vm808, 1, 0
      %v841 = vsel %vm809, 1, 0
      %v842 = vsel %vm810, 1, 0
      %v843 = vsel %vm811, 1, 0
      %v844 = vsel %vm812, 1, 0
      %v845 = vsel %vm813, 1, 0
      %v846 = vsel %vm814, 1, 0
      %v847 = vsel %vm815, 1, 0
      %v848 = vsel %vm816, 1, 0
      %v849 = vsel %vm817, 1, 0
      %v850 = vsel %vm818, 1, 0
      %v851 = vsel %vm819, 1, 0
      %v852 = vsel %vm820, 1, 0
      %v853 = vsel %vm821, 1, 0
      %v854 = vsel %vm822, 1, 0
      %v855 = vsel %vm823, 1, 0
      %v856 = vsel %vm824, 1, 0
      %v857 = vsel %vm825, 1, 0
      %v858 = vsel %vm826, 1, 0
      %v859 = vsel %vm827, 1, 0
      %v860 = vsel %vm828, 1, 0
      %v861 = vsel %vm829, 1, 0
      %v862 = vsel %vm830, 1, 0
      %v863 = vcvt.s32.f32 %v831
      %v864 = vcvt.s32.f32 %v832
      %v865 = vcvt.s32.f32 %v833
      %v866 = vcvt.s32.f32 %v834
      %v867 = vcvt.s32.f32 %v835
      %v868 = vcvt.s32.f32 %v836
      %v869 = vcvt.s32.f32 %v837
      %v870 = vcvt.s32.f32 %v838
      %v871 = vcvt.s32.f32 %v839
      %v872 = vcvt.s32.f32 %v840
      %v873 = vcvt.s32.f32 %v841
      %v874 = vcvt.s32.f32 %v842
      %v875 = vcvt.s32.f32 %v843
      %v876 = vcvt.s32.f32 %v844
      %v877 = vcvt.s32.f32 %v845
      %v878 = vcvt.s32.f32 %v846
      %v879 = vcvt.s32.f32 %v847
      %v880 = vcvt.s32.f32 %v848
      %v881 = vcvt.s32.f32 %v849
      %v882 = vcvt.s32.f32 %v850
      %v883 = vcvt.s32.f32 %v851
      %v884 = vcvt.s32.f32 %v852
      %v885 = vcvt.s32.f32 %v853
      %v886 = vcvt.s32.f32 %v854
      %v887 = vcvt.s32.f32 %v855
      %v888 = vcvt.s32.f32 %v856
      %v889 = vcvt.s32.f32 %v857
      %v890 = vcvt.s32.f32 %v858
      %v891 = vcvt.s32.f32 %v859
      %v892 = vcvt.s32.f32 %v860
      %v893 = vcvt.s32.f32 %v861
      %v894 = vcvt.s32.f32 %v862
      %vm895 = vcmask 523264
      %v897 = vsel %vm895, %v863, 0
      %v900 = vsel %vm895, %v864, 0
      %v903 = vsel %vm895, %v865, 0
      %v906 = vsel %vm895, %v866, 0
      %v909 = vsel %vm895, %v867, 0
      %v912 = vsel %vm895, %v868, 0
      %v915 = vsel %vm895, %v869, 0
      %v918 = vsel %vm895, %v870, 0
      %v921 = vsel %vm895, %v871, 0
      %v924 = vsel %vm895, %v872, 0
      %v927 = vsel %vm895, %v873, 0
      %v930 = vsel %vm895, %v874, 0
      %v933 = vsel %vm895, %v875, 0
      %v936 = vsel %vm895, %v876, 0
      %v939 = vsel %vm895, %v877, 0
      %v942 = vsel %vm895, %v878, 0
      %v945 = vsel %vm895, %v879, 0
      %v948 = vsel %vm895, %v880, 0
      %v951 = vsel %vm895, %v881, 0
      %v954 = vsel %vm895, %v882, 0
      %v957 = vsel %vm895, %v883, 0
      %v960 = vsel %vm895, %v884, 0
      %v963 = vsel %vm895, %v885, 0
      %v966 = vsel %vm895, %v886, 0
      %v969 = vsel %vm895, %v887, 0
      %v972 = vsel %vm895, %v888, 0
      %v975 = vsel %vm895, %v889, 0
      %v978 = vsel %vm895, %v890, 0
      %v981 = vsel %vm895, %v891, 0
      %v984 = vsel %vm895, %v892, 0
      %v987 = vsel %vm895, %v893, 0
      %v990 = vsel %vm895, %v894, 0
      %992 = vmatprep.subr.mxu0 0.0
      %993 = vmatpush1.msra.mxu0 %v661
      %994 = vmatprep.subr.mxu0 0.0
      %995 = vmatpush1.msra.mxu0 %v662
      %996 = vmatprep.subr.mxu0 0.0
      %997 = vmatpush1.msra.mxu0 %v663
      %998 = vmatprep.subr.mxu0 0.0
      %999 = vmatpush1.msra.mxu0 %v664
      %1000 = vmatprep.subr.mxu0 0.0
      %1001 = vmatpush1.msra.mxu0 %v665
      %1002 = vmatprep.subr.mxu0 0.0
      %1003 = vmatpush1.msra.mxu0 %v666
      %1004 = vmatprep.subr.mxu0 0.0
      %1005 = vmatpush1.msra.mxu0 %v667
      %1006 = vmatprep.subr.mxu0 0.0
      %1007 = vmatpush1.msra.mxu0 %v668
      %1008 = vmatprep.subr.mxu0 0.0
      %1009 = vmatpush1.msra.mxu0 0.0
      %1010 = vmatprep.subr.mxu0 0.0
      %1011 = vmatpush1.msra.mxu0 0.0
      %1012 = vmatprep.subr.mxu0 0.0
      %1013 = vmatpush1.msra.mxu0 0.0
      %1014 = vmatprep.subr.mxu0 0.0
      %1015 = vmatpush1.msra.mxu0 0.0
      %1016 = vmatprep.subr.mxu0 0.0
      %1017 = vmatpush1.msra.mxu0 0.0
      %1018 = vmatprep.subr.mxu0 0.0
      %1019 = vmatpush1.msra.mxu0 0.0
      %1020 = vmatprep.subr.mxu0 0.0
      %1021 = vmatpush1.msra.mxu0 0.0
      %1022 = vmatprep.subr.mxu0 0.0
      %1023 = vmatpush1.msra.mxu0 0.0
      %1024 = vmatprep.subr.mxu0 0.0
      %1025 = vmatpush1.msra.mxu0 0.0
      %1026 = vmatprep.subr.mxu0 0.0
      %1027 = vmatpush1.msra.mxu0 0.0
      %1028 = vmatprep.subr.mxu0 0.0
      %1029 = vmatpush1.msra.mxu0 0.0
      %1030 = vmatprep.subr.mxu0 0.0
      %1031 = vmatpush1.msra.mxu0 0.0
      %1032 = vmatprep.subr.mxu0 0.0
      %1033 = vmatpush1.msra.mxu0 0.0
      %1034 = vmatprep.subr.mxu0 0.0
      %1035 = vmatpush1.msra.mxu0 0.0
      %1036 = vmatprep.subr.mxu0 0.0
      %1037 = vmatpush1.msra.mxu0 0.0
      %1038 = vmatprep.subr.mxu0 0.0
      %1039 = vmatpush1.msra.mxu0 0.0
      %1040 = vmatprep.subr.mxu0 0.0
      %1041 = vmatpush1.msra.mxu0 0.0
      %1042 = vmatprep.subr.mxu0 0.0
      %1043 = vmatpush1.msra.mxu0 0.0
      %1044 = vmatprep.subr.mxu0 0.0
      %1045 = vmatpush1.msra.mxu0 0.0
      %1046 = vmatprep.subr.mxu0 0.0
      %1047 = vmatpush1.msra.mxu0 0.0
      %1048 = vmatprep.subr.mxu0 0.0
      %1049 = vmatpush1.msra.mxu0 0.0
      %1050 = vmatprep.subr.mxu0 0.0
      %1051 = vmatpush1.msra.mxu0 0.0
      %1052 = vmatprep.subr.mxu0 0.0
      %1053 = vmatpush1.msra.mxu0 0.0
      %1054 = vmatprep.subr.mxu0 0.0
      %1055 = vmatpush1.msra.mxu0 0.0
      %1056 = vmatprep.mubr.f32.mxu0 0.0
      %1057 = vmatmul.mubr.f32.gmra.mrb[0].mxu0 %v897
      %v1058 = vpop.f32.mrb[0].mxu0
      %v1059 = vadd.f32 0.0, %v1058
      %v1060 = vpop.f32.mrb[0].mxu0
      %1061 = vmatprep.mubr.f32.mxu0 0.0
      %1062 = vmatmul.mubr.f32.gmra.mrb[0].mxu0 %v900
      %v1063 = vpop.f32.mrb[0].mxu0
      %v1064 = vadd.f32 0.0, %v1063
      %v1065 = vpop.f32.mrb[0].mxu0
      %1066 = vmatprep.mubr.f32.mxu0 0.0
      %1067 = vmatmul.mubr.f32.gmra.mrb[0].mxu0 %v903
      %v1068 = vpop.f32.mrb[0].mxu0
      %v1069 = vadd.f32 0.0, %v1068
      %v1070 = vpop.f32.mrb[0].mxu0
      %1071 = vmatprep.mubr.f32.mxu0 0.0
      %1072 = vmatmul.mubr.f32.gmra.mrb[0].mxu0 %v906
      %v1073 = vpop.f32.mrb[0].mxu0
      %v1074 = vadd.f32 0.0, %v1073
      %v1075 = vpop.f32.mrb[0].mxu0
      %1076 = vmatprep.mubr.f32.mxu0 0.0
      %1077 = vmatmul.mubr.f32.gmra.mrb[0].mxu0 %v909
      %v1078 = vpop.f32.mrb[0].mxu0
      %v1079 = vadd.f32 0.0, %v1078
      %v1080 = vpop.f32.mrb[0].mxu0
      %1081 = vmatprep.mubr.f32.mxu0 0.0
      %1082 = vmatmul.mubr.f32.gmra.mrb[0].mxu0 %v912
      %v1083 = vpop.f32.mrb[0].mxu0
      %v1084 = vadd.f32 0.0, %v1083
      %v1085 = vpop.f32.mrb[0].mxu0
      %1086 = vmatprep.mubr.f32.mxu0 0.0
      %1087 = vmatmul.mubr.f32.gmra.mrb[0].mxu0 %v915
      %v1088 = vpop.f32.mrb[0].mxu0
      %v1089 = vadd.f32 0.0, %v1088
      %v1090 = vpop.f32.mrb[0].mxu0
      %1091 = vmatprep.mubr.f32.mxu0 0.0
      %1092 = vmatmul.mubr.f32.gmra.mrb[0].mxu0 %v918
      %v1093 = vpop.f32.mrb[0].mxu0
      %v1094 = vadd.f32 0.0, %v1093
      %v1095 = vpop.f32.mrb[0].mxu0
      %1096 = vmatprep.mubr.f32.mxu0 0.0
      %1097 = vmatmul.mubr.f32.gmra.mrb[0].mxu0 %v921
      %v1098 = vpop.f32.mrb[0].mxu0
      %v1099 = vadd.f32 0.0, %v1098
      %v1100 = vpop.f32.mrb[0].mxu0
      %1101 = vmatprep.mubr.f32.mxu0 0.0
      %1102 = vmatmul.mubr.f32.gmra.mrb[0].mxu0 %v924
      %v1103 = vpop.f32.mrb[0].mxu0
      %v1104 = vadd.f32 0.0, %v1103
      %v1105 = vpop.f32.mrb[0].mxu0
      %1106 = vmatprep.mubr.f32.mxu0 0.0
      %1107 = vmatmul.mubr.f32.gmra.mrb[0].mxu0 %v927
      %v1108 = vpop.f32.mrb[0].mxu0
      %v1109 = vadd.f32 0.0, %v1108
      %v1110 = vpop.f32.mrb[0].mxu0
      %1111 = vmatprep.mubr.f32.mxu0 0.0
      %1112 = vmatmul.mubr.f32.gmra.mrb[0].mxu0 %v930
      %v1113 = vpop.f32.mrb[0].mxu0
      %v1114 = vadd.f32 0.0, %v1113
      %v1115 = vpop.f32.mrb[0].mxu0
      %1116 = vmatprep.mubr.f32.mxu0 0.0
      %1117 = vmatmul.mubr.f32.gmra.mrb[0].mxu0 %v933
      %v1118 = vpop.f32.mrb[0].mxu0
      %v1119 = vadd.f32 0.0, %v1118
      %v1120 = vpop.f32.mrb[0].mxu0
      %1121 = vmatprep.mubr.f32.mxu0 0.0
      %1122 = vmatmul.mubr.f32.gmra.mrb[0].mxu0 %v936
      %v1123 = vpop.f32.mrb[0].mxu0
      %v1124 = vadd.f32 0.0, %v1123
      %v1125 = vpop.f32.mrb[0].mxu0
      %1126 = vmatprep.mubr.f32.mxu0 0.0
      %1127 = vmatmul.mubr.f32.gmra.mrb[0].mxu0 %v939
      %v1128 = vpop.f32.mrb[0].mxu0
      %v1129 = vadd.f32 0.0, %v1128
      %v1130 = vpop.f32.mrb[0].mxu0
      %1131 = vmatprep.mubr.f32.mxu0 0.0
      %1132 = vmatmul.mubr.f32.gmra.mrb[0].mxu0 %v942
      %v1133 = vpop.f32.mrb[0].mxu0
      %v1134 = vadd.f32 0.0, %v1133
      %v1135 = vpop.f32.mrb[0].mxu0
      %1136 = vmatprep.mubr.f32.mxu0 0.0
      %1137 = vmatmul.mubr.f32.gmra.mrb[0].mxu0 %v945
      %v1138 = vpop.f32.mrb[0].mxu0
      %v1139 = vadd.f32 0.0, %v1138
      %v1140 = vpop.f32.mrb[0].mxu0
      %1141 = vmatprep.mubr.f32.mxu0 0.0
      %1142 = vmatmul.mubr.f32.gmra.mrb[0].mxu0 %v948
      %v1143 = vpop.f32.mrb[0].mxu0
      %v1144 = vadd.f32 0.0, %v1143
      %v1145 = vpop.f32.mrb[0].mxu0
      %1146 = vmatprep.mubr.f32.mxu0 0.0
      %1147 = vmatmul.mubr.f32.gmra.mrb[0].mxu0 %v951
      %v1148 = vpop.f32.mrb[0].mxu0
      %v1149 = vadd.f32 0.0, %v1148
      %v1150 = vpop.f32.mrb[0].mxu0
      %1151 = vmatprep.mubr.f32.mxu0 0.0
      %1152 = vmatmul.mubr.f32.gmra.mrb[0].mxu0 %v954
      %v1153 = vpop.f32.mrb[0].mxu0
      %v1154 = vadd.f32 0.0, %v1153
      %v1155 = vpop.f32.mrb[0].mxu0
      %1156 = vmatprep.mubr.f32.mxu0 0.0
      %1157 = vmatmul.mubr.f32.gmra.mrb[0].mxu0 %v957
      %v1158 = vpop.f32.mrb[0].mxu0
      %v1159 = vadd.f32 0.0, %v1158
      %v1160 = vpop.f32.mrb[0].mxu0
      %1161 = vmatprep.mubr.f32.mxu0 0.0
      %1162 = vmatmul.mubr.f32.gmra.mrb[0].mxu0 %v960
      %v1163 = vpop.f32.mrb[0].mxu0
      %v1164 = vadd.f32 0.0, %v1163
      %v1165 = vpop.f32.mrb[0].mxu0
      %1166 = vmatprep.mubr.f32.mxu0 0.0
      %1167 = vmatmul.mubr.f32.gmra.mrb[0].mxu0 %v963
      %v1168 = vpop.f32.mrb[0].mxu0
      %v1169 = vadd.f32 0.0, %v1168
      %v1170 = vpop.f32.mrb[0].mxu0
      %1171 = vmatprep.mubr.f32.mxu0 0.0
      %1172 = vmatmul.mubr.f32.gmra.mrb[0].mxu0 %v966
      %v1173 = vpop.f32.mrb[0].mxu0
      %v1174 = vadd.f32 0.0, %v1173
      %v1175 = vpop.f32.mrb[0].mxu0
      %1176 = vmatprep.mubr.f32.mxu0 0.0
      %1177 = vmatmul.mubr.f32.gmra.mrb[0].mxu0 %v969
      %v1178 = vpop.f32.mrb[0].mxu0
      %v1179 = vadd.f32 0.0, %v1178
      %v1180 = vpop.f32.mrb[0].mxu0
      %1181 = vmatprep.mubr.f32.mxu0 0.0
      %1182 = vmatmul.mubr.f32.gmra.mrb[0].mxu0 %v972
      %v1183 = vpop.f32.mrb[0].mxu0
      %v1184 = vadd.f32 0.0, %v1183
      %v1185 = vpop.f32.mrb[0].mxu0
      %1186 = vmatprep.mubr.f32.mxu0 0.0
      %1187 = vmatmul.mubr.f32.gmra.mrb[0].mxu0 %v975
      %v1188 = vpop.f32.mrb[0].mxu0
      %v1189 = vadd.f32 0.0, %v1188
      %v1190 = vpop.f32.mrb[0].mxu0
      %1191 = vmatprep.mubr.f32.mxu0 0.0
      %1192 = vmatmul.mubr.f32.gmra.mrb[0].mxu0 %v978
      %v1193 = vpop.f32.mrb[0].mxu0
      %v1194 = vadd.f32 0.0, %v1193
      %v1195 = vpop.f32.mrb[0].mxu0
      %1196 = vmatprep.mubr.f32.mxu0 0.0
      %1197 = vmatmul.mubr.f32.gmra.mrb[0].mxu0 %v981
      %v1198 = vpop.f32.mrb[0].mxu0
      %v1199 = vadd.f32 0.0, %v1198
      %v1200 = vpop.f32.mrb[0].mxu0
      %1201 = vmatprep.mubr.f32.mxu0 0.0
      %1202 = vmatmul.mubr.f32.gmra.mrb[0].mxu0 %v984
      %v1203 = vpop.f32.mrb[0].mxu0
      %v1204 = vadd.f32 0.0, %v1203
      %v1205 = vpop.f32.mrb[0].mxu0
      %1206 = vmatprep.mubr.f32.mxu0 0.0
      %1207 = vmatmul.mubr.f32.gmra.mrb[0].mxu0 %v987
      %v1208 = vpop.f32.mrb[0].mxu0
      %v1209 = vadd.f32 0.0, %v1208
      %v1210 = vpop.f32.mrb[0].mxu0
      %1211 = vmatprep.mubr.f32.mxu0 0.0
      %1212 = vmatmul.mubr.f32.gmra.mrb[0].mxu0 %v990
      %v1213 = vpop.f32.mrb[0].mxu0
      %v1214 = vadd.f32 0.0, %v1213
      %v1215 = vpop.f32.mrb[0].mxu0
      %1216 = vdwg.mxu0
      %v1217 = vld [vmem:[%s7] sm:$0xff]
      %v1218 = vld [vmem:[%s7 + $0x8] sm:$0xff]
      %v1219 = vld [vmem:[%s7 + $0x10] sm:$0xff]
      %v1220 = vld [vmem:[%s7 + $0x18] sm:$0xff]
      %v1221 = vld [vmem:[%s8] sm:$0xff]
      %v1222 = vld [vmem:[%s8 + $0x8] sm:$0xff]
      %v1223 = vld [vmem:[%s8 + $0x10] sm:$0xff]
      %v1224 = vld [vmem:[%s8 + $0x18] sm:$0xff]
      %vm1225 = vcmask 261120
      %v1227 = vsel %vm1225, %v1139, 0
      %v1230 = vsel %vm1225, %v1144, 0
      %v1233 = vsel %vm1225, %v1149, 0
      %v1236 = vsel %vm1225, %v1154, 0
      %v1239 = vsel %vm1225, %v1159, 0
      %v1242 = vsel %vm1225, %v1164, 0
      %v1245 = vsel %vm1225, %v1169, 0
      %v1248 = vsel %vm1225, %v1174, 0
      %v1251 = vsel %vm1225, %v1179, 0
      %v1254 = vsel %vm1225, %v1184, 0
      %v1257 = vsel %vm1225, %v1189, 0
      %v1260 = vsel %vm1225, %v1194, 0
      %v1263 = vsel %vm1225, %v1199, 0
      %v1266 = vsel %vm1225, %v1204, 0
      %v1269 = vsel %vm1225, %v1209, 0
      %v1272 = vsel %vm1225, %v1214, 0
      %1274 = vmatprep.subr.mxu0 0.0
      %1275 = vmatpush1.msra.mxu0 %v1221
      %1276 = vmatprep.subr.mxu0 0.0
      %1277 = vmatpush1.msra.mxu0 %v1222
      %1278 = vmatprep.subr.mxu0 0.0
      %1279 = vmatpush1.msra.mxu0 %v1223
      %1280 = vmatprep.subr.mxu0 0.0
      %1281 = vmatpush1.msra.mxu0 %v1224
      %1282 = vmatprep.subr.mxu0 0.0
      %1283 = vmatpush1.msra.mxu0 0.0
      %1284 = vmatprep.subr.mxu0 0.0
      %1285 = vmatpush1.msra.mxu0 0.0
      %1286 = vmatprep.subr.mxu0 0.0
      %1287 = vmatpush1.msra.mxu0 0.0
      %1288 = vmatprep.subr.mxu0 0.0
      %1289 = vmatpush1.msra.mxu0 0.0
      %1290 = vmatprep.subr.mxu0 0.0
      %1291 = vmatpush1.msra.mxu0 0.0
      %1292 = vmatprep.subr.mxu0 0.0
      %1293 = vmatpush1.msra.mxu0 0.0
      %1294 = vmatprep.subr.mxu0 0.0
      %1295 = vmatpush1.msra.mxu0 0.0
      %1296 = vmatprep.subr.mxu0 0.0
      %1297 = vmatpush1.msra.mxu0 0.0
      %1298 = vmatprep.subr.mxu0 0.0
      %1299 = vmatpush1.msra.mxu0 0.0
      %1300 = vmatprep.subr.mxu0 0.0
      %1301 = vmatpush1.msra.mxu0 0.0
      %1302 = vmatprep.subr.mxu0 0.0
      %1303 = vmatpush1.msra.mxu0 0.0
      %1304 = vmatprep.subr.mxu0 0.0
      %1305 = vmatpush1.msra.mxu0 0.0
      %1306 = vmatprep.subr.mxu0 0.0
      %1307 = vmatpush1.msra.mxu0 0.0
      %1308 = vmatprep.subr.mxu0 0.0
      %1309 = vmatpush1.msra.mxu0 0.0
      %1310 = vmatprep.subr.mxu0 0.0
      %1311 = vmatpush1.msra.mxu0 0.0
      %1312 = vmatprep.subr.mxu0 0.0
      %1313 = vmatpush1.msra.mxu0 0.0
      %1314 = vmatprep.subr.mxu0 0.0
      %1315 = vmatpush1.msra.mxu0 0.0
      %1316 = vmatprep.subr.mxu0 0.0
      %1317 = vmatpush1.msra.mxu0 0.0
      %1318 = vmatprep.subr.mxu0 0.0
      %1319 = vmatpush1.msra.mxu0 0.0
      %1320 = vmatprep.subr.mxu0 0.0
      %1321 = vmatpush1.msra.mxu0 0.0
      %1322 = vmatprep.subr.mxu0 0.0
      %1323 = vmatpush1.msra.mxu0 0.0
      %1324 = vmatprep.subr.mxu0 0.0
      %1325 = vmatpush1.msra.mxu0 0.0
      %1326 = vmatprep.subr.mxu0 0.0
      %1327 = vmatpush1.msra.mxu0 0.0
      %1328 = vmatprep.subr.mxu0 0.0
      %1329 = vmatpush1.msra.mxu0 0.0
      %1330 = vmatprep.subr.mxu0 0.0
      %1331 = vmatpush1.msra.mxu0 0.0
      %1332 = vmatprep.subr.mxu0 0.0
      %1333 = vmatpush1.msra.mxu0 0.0
      %1334 = vmatprep.subr.mxu0 0.0
      %1335 = vmatpush1.msra.mxu0 0.0
      %1336 = vmatprep.subr.mxu0 0.0
      %1337 = vmatpush1.msra.mxu0 0.0
      %1338 = vmatprep.mubr.f32.mxu0 0.0
      %1339 = vmatmul.mubr.f32.gmra.mrb[0].mxu0 %v1227
      %v1340 = vpop.f32.mrb[0].mxu0
      %v1341 = vadd.f32 0.0, %v1340
      %v1342 = vpop.f32.mrb[0].mxu0
      %1343 = vmatprep.mubr.f32.mxu0 0.0
      %1344 = vmatmul.mubr.f32.gmra.mrb[0].mxu0 %v1230
      %v1345 = vpop.f32.mrb[0].mxu0
      %v1346 = vadd.f32 0.0, %v1345
      %v1347 = vpop.f32.mrb[0].mxu0
      %1348 = vmatprep.mubr.f32.mxu0 0.0
      %1349 = vmatmul.mubr.f32.gmra.mrb[0].mxu0 %v1233
      %v1350 = vpop.f32.mrb[0].mxu0
      %v1351 = vadd.f32 0.0, %v1350
      %v1352 = vpop.f32.mrb[0].mxu0
      %1353 = vmatprep.mubr.f32.mxu0 0.0
      %1354 = vmatmul.mubr.f32.gmra.mrb[0].mxu0 %v1236
      %v1355 = vpop.f32.mrb[0].mxu0
      %v1356 = vadd.f32 0.0, %v1355
      %v1357 = vpop.f32.mrb[0].mxu0
      %1358 = vmatprep.mubr.f32.mxu0 0.0
      %1359 = vmatmul.mubr.f32.gmra.mrb[0].mxu0 %v1239
      %v1360 = vpop.f32.mrb[0].mxu0
      %v1361 = vadd.f32 0.0, %v1360
      %v1362 = vpop.f32.mrb[0].mxu0
      %1363 = vmatprep.mubr.f32.mxu0 0.0
      %1364 = vmatmul.mubr.f32.gmra.mrb[0].mxu0 %v1242
      %v1365 = vpop.f32.mrb[0].mxu0
      %v1366 = vadd.f32 0.0, %v1365
      %v1367 = vpop.f32.mrb[0].mxu0
      %1368 = vmatprep.mubr.f32.mxu0 0.0
      %1369 = vmatmul.mubr.f32.gmra.mrb[0].mxu0 %v1245
      %v1370 = vpop.f32.mrb[0].mxu0
      %v1371 = vadd.f32 0.0, %v1370
      %v1372 = vpop.f32.mrb[0].mxu0
      %1373 = vmatprep.mubr.f32.mxu0 0.0
      %1374 = vmatmul.mubr.f32.gmra.mrb[0].mxu0 %v1248
      %v1375 = vpop.f32.mrb[0].mxu0
      %v1376 = vadd.f32 0.0, %v1375
      %v1377 = vpop.f32.mrb[0].mxu0
      %1378 = vmatprep.mubr.f32.mxu0 0.0
      %1379 = vmatmul.mubr.f32.gmra.mrb[0].mxu0 %v1251
      %v1380 = vpop.f32.mrb[0].mxu0
      %v1381 = vadd.f32 0.0, %v1380
      %v1382 = vpop.f32.mrb[0].mxu0
      %1383 = vmatprep.mubr.f32.mxu0 0.0
      %1384 = vmatmul.mubr.f32.gmra.mrb[0].mxu0 %v1254
      %v1385 = vpop.f32.mrb[0].mxu0
      %v1386 = vadd.f32 0.0, %v1385
      %v1387 = vpop.f32.mrb[0].mxu0
      %1388 = vmatprep.mubr.f32.mxu0 0.0
      %1389 = vmatmul.mubr.f32.gmra.mrb[0].mxu0 %v1257
      %v1390 = vpop.f32.mrb[0].mxu0
      %v1391 = vadd.f32 0.0, %v1390
      %v1392 = vpop.f32.mrb[0].mxu0
      %1393 = vmatprep.mubr.f32.mxu0 0.0
      %1394 = vmatmul.mubr.f32.gmra.mrb[0].mxu0 %v1260
      %v1395 = vpop.f32.mrb[0].mxu0
      %v1396 = vadd.f32 0.0, %v1395
      %v1397 = vpop.f32.mrb[0].mxu0
      %1398 = vmatprep.mubr.f32.mxu0 0.0
      %1399 = vmatmul.mubr.f32.gmra.mrb[0].mxu0 %v1263
      %v1400 = vpop.f32.mrb[0].mxu0
      %v1401 = vadd.f32 0.0, %v1400
      %v1402 = vpop.f32.mrb[0].mxu0
      %1403 = vmatprep.mubr.f32.mxu0 0.0
      %1404 = vmatmul.mubr.f32.gmra.mrb[0].mxu0 %v1266
      %v1405 = vpop.f32.mrb[0].mxu0
      %v1406 = vadd.f32 0.0, %v1405
      %v1407 = vpop.f32.mrb[0].mxu0
      %1408 = vmatprep.mubr.f32.mxu0 0.0
      %1409 = vmatmul.mubr.f32.gmra.mrb[0].mxu0 %v1269
      %v1410 = vpop.f32.mrb[0].mxu0
      %v1411 = vadd.f32 0.0, %v1410
      %v1412 = vpop.f32.mrb[0].mxu0
      %1413 = vmatprep.mubr.f32.mxu0 0.0
      %1414 = vmatmul.mubr.f32.gmra.mrb[0].mxu0 %v1272
      %v1415 = vpop.f32.mrb[0].mxu0
      %v1416 = vadd.f32 0.0, %v1415
      %v1417 = vpop.f32.mrb[0].mxu0
      %1418 = vdwg.mxu0
      %v1420 = vsel %vm1225, %v1059, 0
      %v1423 = vsel %vm1225, %v1064, 0
      %v1426 = vsel %vm1225, %v1069, 0
      %v1429 = vsel %vm1225, %v1074, 0
      %v1432 = vsel %vm1225, %v1079, 0
      %v1435 = vsel %vm1225, %v1084, 0
      %v1438 = vsel %vm1225, %v1089, 0
      %v1441 = vsel %vm1225, %v1094, 0
      %v1444 = vsel %vm1225, %v1099, 0
      %v1447 = vsel %vm1225, %v1104, 0
      %v1450 = vsel %vm1225, %v1109, 0
      %v1453 = vsel %vm1225, %v1114, 0
      %v1456 = vsel %vm1225, %v1119, 0
      %v1459 = vsel %vm1225, %v1124, 0
      %v1462 = vsel %vm1225, %v1129, 0
      %v1465 = vsel %vm1225, %v1134, 0
      %1467 = vmatprep.subr.mxu0 0.0
      %1468 = vmatpush1.msra.mxu0 %v1217
      %1469 = vmatprep.subr.mxu0 0.0
      %1470 = vmatpush1.msra.mxu0 %v1218
      %1471 = vmatprep.subr.mxu0 0.0
      %1472 = vmatpush1.msra.mxu0 %v1219
      %1473 = vmatprep.subr.mxu0 0.0
      %1474 = vmatpush1.msra.mxu0 %v1220
      %1475 = vmatprep.subr.mxu0 0.0
      %1476 = vmatpush1.msra.mxu0 0.0
      %1477 = vmatprep.subr.mxu0 0.0
      %1478 = vmatpush1.msra.mxu0 0.0
      %1479 = vmatprep.subr.mxu0 0.0
      %1480 = vmatpush1.msra.mxu0 0.0
      %1481 = vmatprep.subr.mxu0 0.0
      %1482 = vmatpush1.msra.mxu0 0.0
      %1483 = vmatprep.subr.mxu0 0.0
      %1484 = vmatpush1.msra.mxu0 0.0
      %1485 = vmatprep.subr.mxu0 0.0
      %1486 = vmatpush1.msra.mxu0 0.0
      %1487 = vmatprep.subr.mxu0 0.0
      %1488 = vmatpush1.msra.mxu0 0.0
      %1489 = vmatprep.subr.mxu0 0.0
      %1490 = vmatpush1.msra.mxu0 0.0
      %1491 = vmatprep.subr.mxu0 0.0
      %1492 = vmatpush1.msra.mxu0 0.0
      %1493 = vmatprep.subr.mxu0 0.0
      %1494 = vmatpush1.msra.mxu0 0.0
      %1495 = vmatprep.subr.mxu0 0.0
      %1496 = vmatpush1.msra.mxu0 0.0
      %1497 = vmatprep.subr.mxu0 0.0
      %1498 = vmatpush1.msra.mxu0 0.0
      %1499 = vmatprep.subr.mxu0 0.0
      %1500 = vmatpush1.msra.mxu0 0.0
      %1501 = vmatprep.subr.mxu0 0.0
      %1502 = vmatpush1.msra.mxu0 0.0
      %1503 = vmatprep.subr.mxu0 0.0
      %1504 = vmatpush1.msra.mxu0 0.0
      %1505 = vmatprep.subr.mxu0 0.0
      %1506 = vmatpush1.msra.mxu0 0.0
      %1507 = vmatprep.subr.mxu0 0.0
      %1508 = vmatpush1.msra.mxu0 0.0
      %1509 = vmatprep.subr.mxu0 0.0
      %1510 = vmatpush1.msra.mxu0 0.0
      %1511 = vmatprep.subr.mxu0 0.0
      %1512 = vmatpush1.msra.mxu0 0.0
      %1513 = vmatprep.subr.mxu0 0.0
      %1514 = vmatpush1.msra.mxu0 0.0
      %1515 = vmatprep.subr.mxu0 0.0
      %1516 = vmatpush1.msra.mxu0 0.0
      %1517 = vmatprep.subr.mxu0 0.0
      %1518 = vmatpush1.msra.mxu0 0.0
      %1519 = vmatprep.subr.mxu0 0.0
      %1520 = vmatpush1.msra.mxu0 0.0
      %1521 = vmatprep.subr.mxu0 0.0
      %1522 = vmatpush1.msra.mxu0 0.0
      %1523 = vmatprep.subr.mxu0 0.0
      %1524 = vmatpush1.msra.mxu0 0.0
      %1525 = vmatprep.subr.mxu0 0.0
      %1526 = vmatpush1.msra.mxu0 0.0
      %1527 = vmatprep.subr.mxu0 0.0
      %1528 = vmatpush1.msra.mxu0 0.0
      %1529 = vmatprep.subr.mxu0 0.0
      %1530 = vmatpush1.msra.mxu0 0.0
      %1531 = vmatprep.mubr.f32.mxu0 0.0
      %1532 = vmatmul.mubr.f32.gmra.mrb[0].mxu0 %v1420
      %v1533 = vpop.f32.mrb[0].mxu0
      %v1534 = vadd.f32 %v1341, %v1533
      %v1535 = vpop.f32.mrb[0].mxu0
      %1536 = vmatprep.mubr.f32.mxu0 0.0
      %1537 = vmatmul.mubr.f32.gmra.mrb[0].mxu0 %v1423
      %v1538 = vpop.f32.mrb[0].mxu0
      %v1539 = vadd.f32 %v1346, %v1538
      %v1540 = vpop.f32.mrb[0].mxu0
      %1541 = vmatprep.mubr.f32.mxu0 0.0
      %1542 = vmatmul.mubr.f32.gmra.mrb[0].mxu0 %v1426
      %v1543 = vpop.f32.mrb[0].mxu0
      %v1544 = vadd.f32 %v1351, %v1543
      %v1545 = vpop.f32.mrb[0].mxu0
      %1546 = vmatprep.mubr.f32.mxu0 0.0
      %1547 = vmatmul.mubr.f32.gmra.mrb[0].mxu0 %v1429
      %v1548 = vpop.f32.mrb[0].mxu0
      %v1549 = vadd.f32 %v1356, %v1548
      %v1550 = vpop.f32.mrb[0].mxu0
      %1551 = vmatprep.mubr.f32.mxu0 0.0
      %1552 = vmatmul.mubr.f32.gmra.mrb[0].mxu0 %v1432
      %v1553 = vpop.f32.mrb[0].mxu0
      %v1554 = vadd.f32 %v1361, %v1553
      %v1555 = vpop.f32.mrb[0].mxu0
      %1556 = vmatprep.mubr.f32.mxu0 0.0
      %1557 = vmatmul.mubr.f32.gmra.mrb[0].mxu0 %v1435
      %v1558 = vpop.f32.mrb[0].mxu0
      %v1559 = vadd.f32 %v1366, %v1558
      %v1560 = vpop.f32.mrb[0].mxu0
      %1561 = vmatprep.mubr.f32.mxu0 0.0
      %1562 = vmatmul.mubr.f32.gmra.mrb[0].mxu0 %v1438
      %v1563 = vpop.f32.mrb[0].mxu0
      %v1564 = vadd.f32 %v1371, %v1563
      %v1565 = vpop.f32.mrb[0].mxu0
      %1566 = vmatprep.mubr.f32.mxu0 0.0
      %1567 = vmatmul.mubr.f32.gmra.mrb[0].mxu0 %v1441
      %v1568 = vpop.f32.mrb[0].mxu0
      %v1569 = vadd.f32 %v1376, %v1568
      %v1570 = vpop.f32.mrb[0].mxu0
      %1571 = vmatprep.mubr.f32.mxu0 0.0
      %1572 = vmatmul.mubr.f32.gmra.mrb[0].mxu0 %v1444
      %v1573 = vpop.f32.mrb[0].mxu0
      %v1574 = vadd.f32 %v1381, %v1573
      %v1575 = vpop.f32.mrb[0].mxu0
      %1576 = vmatprep.mubr.f32.mxu0 0.0
      %1577 = vmatmul.mubr.f32.gmra.mrb[0].mxu0 %v1447
      %v1578 = vpop.f32.mrb[0].mxu0
      %v1579 = vadd.f32 %v1386, %v1578
      %v1580 = vpop.f32.mrb[0].mxu0
      %1581 = vmatprep.mubr.f32.mxu0 0.0
      %1582 = vmatmul.mubr.f32.gmra.mrb[0].mxu0 %v1450
      %v1583 = vpop.f32.mrb[0].mxu0
      %v1584 = vadd.f32 %v1391, %v1583
      %v1585 = vpop.f32.mrb[0].mxu0
      %1586 = vmatprep.mubr.f32.mxu0 0.0
      %1587 = vmatmul.mubr.f32.gmra.mrb[0].mxu0 %v1453
      %v1588 = vpop.f32.mrb[0].mxu0
      %v1589 = vadd.f32 %v1396, %v1588
      %v1590 = vpop.f32.mrb[0].mxu0
      %1591 = vmatprep.mubr.f32.mxu0 0.0
      %1592 = vmatmul.mubr.f32.gmra.mrb[0].mxu0 %v1456
      %v1593 = vpop.f32.mrb[0].mxu0
      %v1594 = vadd.f32 %v1401, %v1593
      %v1595 = vpop.f32.mrb[0].mxu0
      %1596 = vmatprep.mubr.f32.mxu0 0.0
      %1597 = vmatmul.mubr.f32.gmra.mrb[0].mxu0 %v1459
      %v1598 = vpop.f32.mrb[0].mxu0
      %v1599 = vadd.f32 %v1406, %v1598
      %v1600 = vpop.f32.mrb[0].mxu0
      %1601 = vmatprep.mubr.f32.mxu0 0.0
      %1602 = vmatmul.mubr.f32.gmra.mrb[0].mxu0 %v1462
      %v1603 = vpop.f32.mrb[0].mxu0
      %v1604 = vadd.f32 %v1411, %v1603
      %v1605 = vpop.f32.mrb[0].mxu0
      %1606 = vmatprep.mubr.f32.mxu0 0.0
      %1607 = vmatmul.mubr.f32.gmra.mrb[0].mxu0 %v1465
      %v1608 = vpop.f32.mrb[0].mxu0
      %v1609 = vadd.f32 %v1416, %v1608
      %v1610 = vpop.f32.mrb[0].mxu0
      %1611 = vdwg.mxu0
      %v1612 = vld [vmem:[%s484] sm:$0xff]
      %v1613 = vld [vmem:[%s484 + $0x8] sm:$0xff]
      %v1614 = vld [vmem:[%s484 + $0x10] sm:$0xff]
      %v1615 = vld [vmem:[%s484 + $0x18] sm:$0xff]
      %v1616 = vld [vmem:[%s484 + $0x20] sm:$0xff]
      %v1617 = vld [vmem:[%s484 + $0x28] sm:$0xff]
      %v1618 = vld [vmem:[%s484 + $0x30] sm:$0xff]
      %v1619 = vld [vmem:[%s484 + $0x38] sm:$0xff]
      %v1620 = vld [vmem:[%s484 + $0x40] sm:$0xff]
      %v1621 = vld [vmem:[%s484 + $0x48] sm:$0xff]
      %v1622 = vld [vmem:[%s484 + $0x50] sm:$0xff]
      %v1623 = vld [vmem:[%s484 + $0x58] sm:$0xff]
      %v1624 = vld [vmem:[%s484 + $0x60] sm:$0xff]
      %v1625 = vld [vmem:[%s484 + $0x68] sm:$0xff]
      %v1626 = vld [vmem:[%s484 + $0x70] sm:$0xff]
      %v1627 = vld [vmem:[%s484 + $0x78] sm:$0xff]
      %v1628 = vld [vmem:[%s9] sm:$0xf]
      %vm1629 = vcmask 31744
      %v1631 = vsel %vm1629, %v1612, 0
      %v1634 = vsel %vm1629, %v1613, 0
      %v1637 = vsel %vm1629, %v1614, 0
      %v1640 = vsel %vm1629, %v1615, 0
      %v1643 = vsel %vm1629, %v1616, 0
      %v1646 = vsel %vm1629, %v1617, 0
      %v1649 = vsel %vm1629, %v1618, 0
      %v1652 = vsel %vm1629, %v1619, 0
      %v1655 = vsel %vm1629, %v1620, 0
      %v1658 = vsel %vm1629, %v1621, 0
      %v1661 = vsel %vm1629, %v1622, 0
      %v1664 = vsel %vm1629, %v1623, 0
      %v1667 = vsel %vm1629, %v1624, 0
      %v1670 = vsel %vm1629, %v1625, 0
      %v1673 = vsel %vm1629, %v1626, 0
      %v1676 = vsel %vm1629, %v1627, 0
      %vm1678 = vcmask 1043456
      %v1680 = vsel %vm1678, %v1628, 0
      %1682 = vmatprep.subr.mxu0 0.0
      %1683 = vmatpush1.msra.mxu0 %v1680
      %1684 = vmatprep.subr.mxu0 0.0
      %1685 = vmatpush1.msra.mxu0 0.0
      %1686 = vmatprep.subr.mxu0 0.0
      %1687 = vmatpush1.msra.mxu0 0.0
      %1688 = vmatprep.subr.mxu0 0.0
      %1689 = vmatpush1.msra.mxu0 0.0
      %1690 = vmatprep.subr.mxu0 0.0
      %1691 = vmatpush1.msra.mxu0 0.0
      %1692 = vmatprep.subr.mxu0 0.0
      %1693 = vmatpush1.msra.mxu0 0.0
      %1694 = vmatprep.subr.mxu0 0.0
      %1695 = vmatpush1.msra.mxu0 0.0
      %1696 = vmatprep.subr.mxu0 0.0
      %1697 = vmatpush1.msra.mxu0 0.0
      %1698 = vmatprep.subr.mxu0 0.0
      %1699 = vmatpush1.msra.mxu0 0.0
      %1700 = vmatprep.subr.mxu0 0.0
      %1701 = vmatpush1.msra.mxu0 0.0
      %1702 = vmatprep.subr.mxu0 0.0
      %1703 = vmatpush1.msra.mxu0 0.0
      %1704 = vmatprep.subr.mxu0 0.0
      %1705 = vmatpush1.msra.mxu0 0.0
      %1706 = vmatprep.subr.mxu0 0.0
      %1707 = vmatpush1.msra.mxu0 0.0
      %1708 = vmatprep.subr.mxu0 0.0
      %1709 = vmatpush1.msra.mxu0 0.0
      %1710 = vmatprep.subr.mxu0 0.0
      %1711 = vmatpush1.msra.mxu0 0.0
      %1712 = vmatprep.subr.mxu0 0.0
      %1713 = vmatpush1.msra.mxu0 0.0
      %1714 = vmatprep.subr.mxu0 0.0
      %1715 = vmatpush1.msra.mxu0 0.0
      %1716 = vmatprep.subr.mxu0 0.0
      %1717 = vmatpush1.msra.mxu0 0.0
      %1718 = vmatprep.subr.mxu0 0.0
      %1719 = vmatpush1.msra.mxu0 0.0
      %1720 = vmatprep.subr.mxu0 0.0
      %1721 = vmatpush1.msra.mxu0 0.0
      %1722 = vmatprep.subr.mxu0 0.0
      %1723 = vmatpush1.msra.mxu0 0.0
      %1724 = vmatprep.subr.mxu0 0.0
      %1725 = vmatpush1.msra.mxu0 0.0
      %1726 = vmatprep.subr.mxu0 0.0
      %1727 = vmatpush1.msra.mxu0 0.0
      %1728 = vmatprep.subr.mxu0 0.0
      %1729 = vmatpush1.msra.mxu0 0.0
      %1730 = vmatprep.subr.mxu0 0.0
      %1731 = vmatpush1.msra.mxu0 0.0
      %1732 = vmatprep.subr.mxu0 0.0
      %1733 = vmatpush1.msra.mxu0 0.0
      %1734 = vmatprep.subr.mxu0 0.0
      %1735 = vmatpush1.msra.mxu0 0.0
      %1736 = vmatprep.subr.mxu0 0.0
      %1737 = vmatpush1.msra.mxu0 0.0
      %1738 = vmatprep.subr.mxu0 0.0
      %1739 = vmatpush1.msra.mxu0 0.0
      %1740 = vmatprep.subr.mxu0 0.0
      %1741 = vmatpush1.msra.mxu0 0.0
      %1742 = vmatprep.subr.mxu0 0.0
      %1743 = vmatpush1.msra.mxu0 0.0
      %1744 = vmatprep.subr.mxu0 0.0
      %1745 = vmatpush1.msra.mxu0 0.0
      %1746 = vmatprep.mubr.f32.mxu0 0.0
      %1747 = vmatmul.mubr.f32.gmra.mrb[0].mxu0 %v1631
      %v1748 = vpop.f32.mrb[0].mxu0
      %v1749 = vadd.f32 0.0, %v1748
      %v1750 = vpop.f32.mrb[0].mxu0
      %1751 = vmatprep.mubr.f32.mxu0 0.0
      %1752 = vmatmul.mubr.f32.gmra.mrb[0].mxu0 %v1634
      %v1753 = vpop.f32.mrb[0].mxu0
      %v1754 = vadd.f32 0.0, %v1753
      %v1755 = vpop.f32.mrb[0].mxu0
      %1756 = vmatprep.mubr.f32.mxu0 0.0
      %1757 = vmatmul.mubr.f32.gmra.mrb[0].mxu0 %v1637
      %v1758 = vpop.f32.mrb[0].mxu0
      %v1759 = vadd.f32 0.0, %v1758
      %v1760 = vpop.f32.mrb[0].mxu0
      %1761 = vmatprep.mubr.f32.mxu0 0.0
      %1762 = vmatmul.mubr.f32.gmra.mrb[0].mxu0 %v1640
      %v1763 = vpop.f32.mrb[0].mxu0
      %v1764 = vadd.f32 0.0, %v1763
      %v1765 = vpop.f32.mrb[0].mxu0
      %1766 = vmatprep.mubr.f32.mxu0 0.0
      %1767 = vmatmul.mubr.f32.gmra.mrb[0].mxu0 %v1643
      %v1768 = vpop.f32.mrb[0].mxu0
      %v1769 = vadd.f32 0.0, %v1768
      %v1770 = vpop.f32.mrb[0].mxu0
      %1771 = vmatprep.mubr.f32.mxu0 0.0
      %1772 = vmatmul.mubr.f32.gmra.mrb[0].mxu0 %v1646
      %v1773 = vpop.f32.mrb[0].mxu0
      %v1774 = vadd.f32 0.0, %v1773
      %v1775 = vpop.f32.mrb[0].mxu0
      %1776 = vmatprep.mubr.f32.mxu0 0.0
      %1777 = vmatmul.mubr.f32.gmra.mrb[0].mxu0 %v1649
      %v1778 = vpop.f32.mrb[0].mxu0
      %v1779 = vadd.f32 0.0, %v1778
      %v1780 = vpop.f32.mrb[0].mxu0
      %1781 = vmatprep.mubr.f32.mxu0 0.0
      %1782 = vmatmul.mubr.f32.gmra.mrb[0].mxu0 %v1652
      %v1783 = vpop.f32.mrb[0].mxu0
      %v1784 = vadd.f32 0.0, %v1783
      %v1785 = vpop.f32.mrb[0].mxu0
      %1786 = vmatprep.mubr.f32.mxu0 0.0
      %1787 = vmatmul.mubr.f32.gmra.mrb[0].mxu0 %v1655
      %v1788 = vpop.f32.mrb[0].mxu0
      %v1789 = vadd.f32 0.0, %v1788
      %v1790 = vpop.f32.mrb[0].mxu0
      %1791 = vmatprep.mubr.f32.mxu0 0.0
      %1792 = vmatmul.mubr.f32.gmra.mrb[0].mxu0 %v1658
      %v1793 = vpop.f32.mrb[0].mxu0
      %v1794 = vadd.f32 0.0, %v1793
      %v1795 = vpop.f32.mrb[0].mxu0
      %1796 = vmatprep.mubr.f32.mxu0 0.0
      %1797 = vmatmul.mubr.f32.gmra.mrb[0].mxu0 %v1661
      %v1798 = vpop.f32.mrb[0].mxu0
      %v1799 = vadd.f32 0.0, %v1798
      %v1800 = vpop.f32.mrb[0].mxu0
      %1801 = vmatprep.mubr.f32.mxu0 0.0
      %1802 = vmatmul.mubr.f32.gmra.mrb[0].mxu0 %v1664
      %v1803 = vpop.f32.mrb[0].mxu0
      %v1804 = vadd.f32 0.0, %v1803
      %v1805 = vpop.f32.mrb[0].mxu0
      %1806 = vmatprep.mubr.f32.mxu0 0.0
      %1807 = vmatmul.mubr.f32.gmra.mrb[0].mxu0 %v1667
      %v1808 = vpop.f32.mrb[0].mxu0
      %v1809 = vadd.f32 0.0, %v1808
      %v1810 = vpop.f32.mrb[0].mxu0
      %1811 = vmatprep.mubr.f32.mxu0 0.0
      %1812 = vmatmul.mubr.f32.gmra.mrb[0].mxu0 %v1670
      %v1813 = vpop.f32.mrb[0].mxu0
      %v1814 = vadd.f32 0.0, %v1813
      %v1815 = vpop.f32.mrb[0].mxu0
      %1816 = vmatprep.mubr.f32.mxu0 0.0
      %1817 = vmatmul.mubr.f32.gmra.mrb[0].mxu0 %v1673
      %v1818 = vpop.f32.mrb[0].mxu0
      %v1819 = vadd.f32 0.0, %v1818
      %v1820 = vpop.f32.mrb[0].mxu0
      %1821 = vmatprep.mubr.f32.mxu0 0.0
      %1822 = vmatmul.mubr.f32.gmra.mrb[0].mxu0 %v1676
      %v1823 = vpop.f32.mrb[0].mxu0
      %v1824 = vadd.f32 0.0, %v1823
      %v1825 = vpop.f32.mrb[0].mxu0
      %1826 = vdwg.mxu0
      %v1827 = vadd.f32 %v1534, %v1749
      %v1828 = vadd.f32 %v1539, %v1754
      %v1829 = vadd.f32 %v1544, %v1759
      %v1830 = vadd.f32 %v1549, %v1764
      %v1831 = vadd.f32 %v1554, %v1769
      %v1832 = vadd.f32 %v1559, %v1774
      %v1833 = vadd.f32 %v1564, %v1779
      %v1834 = vadd.f32 %v1569, %v1784
      %v1835 = vadd.f32 %v1574, %v1789
      %v1836 = vadd.f32 %v1579, %v1794
      %v1837 = vadd.f32 %v1584, %v1799
      %v1838 = vadd.f32 %v1589, %v1804
      %v1839 = vadd.f32 %v1594, %v1809
      %v1840 = vadd.f32 %v1599, %v1814
      %v1841 = vadd.f32 %v1604, %v1819
      %v1842 = vadd.f32 %v1609, %v1824
      %v1843 = vld [vmem:[%s10] sm:$0x1]
      %v1845 = vlaneseq
      %v1846 = vshrl.u32 %v1845, 7
      %v1847 = vsub.s32 0, %v1846
      %v1848 = vrot.slane %v1843, %v1847
      %v1850 = vadd.f32 %v1827, %v1848
      %v1851 = vadd.f32 %v1828, %v1848
      %v1852 = vadd.f32 %v1829, %v1848
      %v1853 = vadd.f32 %v1830, %v1848
      %v1854 = vadd.f32 %v1831, %v1848
      %v1855 = vadd.f32 %v1832, %v1848
      %v1856 = vadd.f32 %v1833, %v1848
      %v1857 = vadd.f32 %v1834, %v1848
      %v1858 = vadd.f32 %v1835, %v1848
      %v1859 = vadd.f32 %v1836, %v1848
      %v1860 = vadd.f32 %v1837, %v1848
      %v1861 = vadd.f32 %v1838, %v1848
      %v1862 = vadd.f32 %v1839, %v1848
      %v1863 = vadd.f32 %v1840, %v1848
      %v1864 = vadd.f32 %v1841, %v1848
      %v1865 = vadd.f32 %v1842, %v1848
      %v1866 = vxor.u32 %v1850, 2147483648
      %v1867 = vxor.u32 %v1851, 2147483648
      %v1868 = vxor.u32 %v1852, 2147483648
      %v1869 = vxor.u32 %v1853, 2147483648
      %v1870 = vxor.u32 %v1854, 2147483648
      %v1871 = vxor.u32 %v1855, 2147483648
      %v1872 = vxor.u32 %v1856, 2147483648
      %v1873 = vxor.u32 %v1857, 2147483648
      %v1874 = vxor.u32 %v1858, 2147483648
      %v1875 = vxor.u32 %v1859, 2147483648
      %v1876 = vxor.u32 %v1860, 2147483648
      %v1877 = vxor.u32 %v1861, 2147483648
      %v1878 = vxor.u32 %v1862, 2147483648
      %v1879 = vxor.u32 %v1863, 2147483648
      %v1880 = vxor.u32 %v1864, 2147483648
      %v1881 = vxor.u32 %v1865, 2147483648
      %v1882 = vmul.f32 %v1866, 1.442695
      %v1883 = vpow.pop %v1882
      %v1884 = vmul.f32 %v1867, 1.442695
      %v1885 = vpow.pop %v1884
      %v1886 = vmul.f32 %v1868, 1.442695
      %v1887 = vpow.pop %v1886
      %v1888 = vmul.f32 %v1869, 1.442695
      %v1889 = vpow.pop %v1888
      %v1890 = vmul.f32 %v1870, 1.442695
      %v1891 = vpow.pop %v1890
      %v1892 = vmul.f32 %v1871, 1.442695
      %v1893 = vpow.pop %v1892
      %v1894 = vmul.f32 %v1872, 1.442695
      %v1895 = vpow.pop %v1894
      %v1896 = vmul.f32 %v1873, 1.442695
      %v1897 = vpow.pop %v1896
      %v1898 = vmul.f32 %v1874, 1.442695
      %v1899 = vpow.pop %v1898
      %v1900 = vmul.f32 %v1875, 1.442695
      %v1901 = vpow.pop %v1900
      %v1902 = vmul.f32 %v1876, 1.442695
      %v1903 = vpow.pop %v1902
      %v1904 = vmul.f32 %v1877, 1.442695
      %v1905 = vpow.pop %v1904
      %v1906 = vmul.f32 %v1878, 1.442695
      %v1907 = vpow.pop %v1906
      %v1908 = vmul.f32 %v1879, 1.442695
      %v1909 = vpow.pop %v1908
      %v1910 = vmul.f32 %v1880, 1.442695
      %v1911 = vpow.pop %v1910
      %v1912 = vmul.f32 %v1881, 1.442695
      %v1913 = vpow.pop %v1912
      %v1914 = vadd.f32 %v1883, 1.0
      %v1915 = vadd.f32 %v1885, 1.0
      %v1916 = vadd.f32 %v1887, 1.0
      %v1917 = vadd.f32 %v1889, 1.0
      %v1918 = vadd.f32 %v1891, 1.0
      %v1919 = vadd.f32 %v1893, 1.0
      %v1920 = vadd.f32 %v1895, 1.0
      %v1921 = vadd.f32 %v1897, 1.0
      %v1922 = vadd.f32 %v1899, 1.0
      %v1923 = vadd.f32 %v1901, 1.0
      %v1924 = vadd.f32 %v1903, 1.0
      %v1925 = vadd.f32 %v1905, 1.0
      %v1926 = vadd.f32 %v1907, 1.0
      %v1927 = vadd.f32 %v1909, 1.0
      %v1928 = vadd.f32 %v1911, 1.0
      %v1929 = vadd.f32 %v1913, 1.0
      %v1930 = vrcp.pop %v1914
      %v1931 = vmul.f32 1.0, %v1930
      %v1932 = vrcp.pop %v1915
      %v1933 = vmul.f32 1.0, %v1932
      %v1934 = vrcp.pop %v1916
      %v1935 = vmul.f32 1.0, %v1934
      %v1936 = vrcp.pop %v1917
      %v1937 = vmul.f32 1.0, %v1936
      %v1938 = vrcp.pop %v1918
      %v1939 = vmul.f32 1.0, %v1938
      %v1940 = vrcp.pop %v1919
      %v1941 = vmul.f32 1.0, %v1940
      %v1942 = vrcp.pop %v1920
      %v1943 = vmul.f32 1.0, %v1942
      %v1944 = vrcp.pop %v1921
      %v1945 = vmul.f32 1.0, %v1944
      %v1946 = vrcp.pop %v1922
      %v1947 = vmul.f32 1.0, %v1946
      %v1948 = vrcp.pop %v1923
      %v1949 = vmul.f32 1.0, %v1948
      %v1950 = vrcp.pop %v1924
      %v1951 = vmul.f32 1.0, %v1950
      %v1952 = vrcp.pop %v1925
      %v1953 = vmul.f32 1.0, %v1952
      %v1954 = vrcp.pop %v1926
      %v1955 = vmul.f32 1.0, %v1954
      %v1956 = vrcp.pop %v1927
      %v1957 = vmul.f32 1.0, %v1956
      %v1958 = vrcp.pop %v1928
      %v1959 = vmul.f32 1.0, %v1958
      %v1960 = vrcp.pop %v1929
      %v1961 = vmul.f32 1.0, %v1960
      %v1962 = vmax.f32 %v1850, 0.0
      %v1963 = vmax.f32 %v1851, 0.0
      %v1964 = vmax.f32 %v1852, 0.0
      %v1965 = vmax.f32 %v1853, 0.0
      %v1966 = vmax.f32 %v1854, 0.0
      %v1967 = vmax.f32 %v1855, 0.0
      %v1968 = vmax.f32 %v1856, 0.0
      %v1969 = vmax.f32 %v1857, 0.0
      %v1970 = vmax.f32 %v1858, 0.0
      %v1971 = vmax.f32 %v1859, 0.0
      %v1972 = vmax.f32 %v1860, 0.0
      %v1973 = vmax.f32 %v1861, 0.0
      %v1974 = vmax.f32 %v1862, 0.0
      %v1975 = vmax.f32 %v1863, 0.0
      %v1976 = vmax.f32 %v1864, 0.0
      %v1977 = vmax.f32 %v1865, 0.0
      %v1978 = vand.u32 2147483647, %v1850
      %v1979 = vand.u32 2147483647, %v1851
      %v1980 = vand.u32 2147483647, %v1852
      %v1981 = vand.u32 2147483647, %v1853
      %v1982 = vand.u32 2147483647, %v1854
      %v1983 = vand.u32 2147483647, %v1855
      %v1984 = vand.u32 2147483647, %v1856
      %v1985 = vand.u32 2147483647, %v1857
      %v1986 = vand.u32 2147483647, %v1858
      %v1987 = vand.u32 2147483647, %v1859
      %v1988 = vand.u32 2147483647, %v1860
      %v1989 = vand.u32 2147483647, %v1861
      %v1990 = vand.u32 2147483647, %v1862
      %v1991 = vand.u32 2147483647, %v1863
      %v1992 = vand.u32 2147483647, %v1864
      %v1993 = vand.u32 2147483647, %v1865
      %v1994 = vsub.f32 0.0, %v1978
      %v1995 = vsub.f32 0.0, %v1979
      %v1996 = vsub.f32 0.0, %v1980
      %v1997 = vsub.f32 0.0, %v1981
      %v1998 = vsub.f32 0.0, %v1982
      %v1999 = vsub.f32 0.0, %v1983
      %v2000 = vsub.f32 0.0, %v1984
      %v2001 = vsub.f32 0.0, %v1985
      %v2002 = vsub.f32 0.0, %v1986
      %v2003 = vsub.f32 0.0, %v1987
      %v2004 = vsub.f32 0.0, %v1988
      %v2005 = vsub.f32 0.0, %v1989
      %v2006 = vsub.f32 0.0, %v1990
      %v2007 = vsub.f32 0.0, %v1991
      %v2008 = vsub.f32 0.0, %v1992
      %v2009 = vsub.f32 0.0, %v1993
      %v2010 = vmul.f32 %v1994, 1.442695
      %v2011 = vpow.pop %v2010
      %v2012 = vmul.f32 %v1995, 1.442695
      %v2013 = vpow.pop %v2012
      %v2014 = vmul.f32 %v1996, 1.442695
      %v2015 = vpow.pop %v2014
      %v2016 = vmul.f32 %v1997, 1.442695
      %v2017 = vpow.pop %v2016
      %v2018 = vmul.f32 %v1998, 1.442695
      %v2019 = vpow.pop %v2018
      %v2020 = vmul.f32 %v1999, 1.442695
      %v2021 = vpow.pop %v2020
      %v2022 = vmul.f32 %v2000, 1.442695
      %v2023 = vpow.pop %v2022
      %v2024 = vmul.f32 %v2001, 1.442695
      %v2025 = vpow.pop %v2024
      %v2026 = vmul.f32 %v2002, 1.442695
      %v2027 = vpow.pop %v2026
      %v2028 = vmul.f32 %v2003, 1.442695
      %v2029 = vpow.pop %v2028
      %v2030 = vmul.f32 %v2004, 1.442695
      %v2031 = vpow.pop %v2030
      %v2032 = vmul.f32 %v2005, 1.442695
      %v2033 = vpow.pop %v2032
      %v2034 = vmul.f32 %v2006, 1.442695
      %v2035 = vpow.pop %v2034
      %v2036 = vmul.f32 %v2007, 1.442695
      %v2037 = vpow.pop %v2036
      %v2038 = vmul.f32 %v2008, 1.442695
      %v2039 = vpow.pop %v2038
      %v2040 = vmul.f32 %v2009, 1.442695
      %v2041 = vpow.pop %v2040
      %v2042 = vadd.f32 %v2011, 1.0
      %v2043 = vlog2.pop %v2042
      %v2044 = vmul.f32 %v2043, 0.6931472
      %v2045 = vmul.f32 -0.5, %v2011
      %v2046 = vadd.f32 %v2045, 1.0
      %v2047 = vmul.f32 %v2046, %v2011
      %v2048 = vand.u32 2147483647, %v2011
      %vm2049 = vcmp.lt.f32.partialorder %v2048, 0.0004427343
      %v2050 = vsel %vm2049, %v2047, %v2044
      %v2051 = vadd.f32 %v2013, 1.0
      %v2052 = vlog2.pop %v2051
      %v2053 = vmul.f32 %v2052, 0.6931472
      %v2054 = vmul.f32 -0.5, %v2013
      %v2055 = vadd.f32 %v2054, 1.0
      %v2056 = vmul.f32 %v2055, %v2013
      %v2057 = vand.u32 2147483647, %v2013
      %vm2058 = vcmp.lt.f32.partialorder %v2057, 0.0004427343
      %v2059 = vsel %vm2058, %v2056, %v2053
      %v2060 = vadd.f32 %v2015, 1.0
      %v2061 = vlog2.pop %v2060
      %v2062 = vmul.f32 %v2061, 0.6931472
      %v2063 = vmul.f32 -0.5, %v2015
      %v2064 = vadd.f32 %v2063, 1.0
      %v2065 = vmul.f32 %v2064, %v2015
      %v2066 = vand.u32 2147483647, %v2015
      %vm2067 = vcmp.lt.f32.partialorder %v2066, 0.0004427343
      %v2068 = vsel %vm2067, %v2065, %v2062
      %v2069 = vadd.f32 %v2017, 1.0
      %v2070 = vlog2.pop %v2069
      %v2071 = vmul.f32 %v2070, 0.6931472
      %v2072 = vmul.f32 -0.5, %v2017
      %v2073 = vadd.f32 %v2072, 1.0
      %v2074 = vmul.f32 %v2073, %v2017
      %v2075 = vand.u32 2147483647, %v2017
      %vm2076 = vcmp.lt.f32.partialorder %v2075, 0.0004427343
      %v2077 = vsel %vm2076, %v2074, %v2071
      %v2078 = vadd.f32 %v2019, 1.0
      %v2079 = vlog2.pop %v2078
      %v2080 = vmul.f32 %v2079, 0.6931472
      %v2081 = vmul.f32 -0.5, %v2019
      %v2082 = vadd.f32 %v2081, 1.0
      %v2083 = vmul.f32 %v2082, %v2019
      %v2084 = vand.u32 2147483647, %v2019
      %vm2085 = vcmp.lt.f32.partialorder %v2084, 0.0004427343
      %v2086 = vsel %vm2085, %v2083, %v2080
      %v2087 = vadd.f32 %v2021, 1.0
      %v2088 = vlog2.pop %v2087
      %v2089 = vmul.f32 %v2088, 0.6931472
      %v2090 = vmul.f32 -0.5, %v2021
      %v2091 = vadd.f32 %v2090, 1.0
      %v2092 = vmul.f32 %v2091, %v2021
      %v2093 = vand.u32 2147483647, %v2021
      %vm2094 = vcmp.lt.f32.partialorder %v2093, 0.0004427343
      %v2095 = vsel %vm2094, %v2092, %v2089
      %v2096 = vadd.f32 %v2023, 1.0
      %v2097 = vlog2.pop %v2096
      %v2098 = vmul.f32 %v2097, 0.6931472
      %v2099 = vmul.f32 -0.5, %v2023
      %v2100 = vadd.f32 %v2099, 1.0
      %v2101 = vmul.f32 %v2100, %v2023
      %v2102 = vand.u32 2147483647, %v2023
      %vm2103 = vcmp.lt.f32.partialorder %v2102, 0.0004427343
      %v2104 = vsel %vm2103, %v2101, %v2098
      %v2105 = vadd.f32 %v2025, 1.0
      %v2106 = vlog2.pop %v2105
      %v2107 = vmul.f32 %v2106, 0.6931472
      %v2108 = vmul.f32 -0.5, %v2025
      %v2109 = vadd.f32 %v2108, 1.0
      %v2110 = vmul.f32 %v2109, %v2025
      %v2111 = vand.u32 2147483647, %v2025
      %vm2112 = vcmp.lt.f32.partialorder %v2111, 0.0004427343
      %v2113 = vsel %vm2112, %v2110, %v2107
      %v2114 = vadd.f32 %v2027, 1.0
      %v2115 = vlog2.pop %v2114
      %v2116 = vmul.f32 %v2115, 0.6931472
      %v2117 = vmul.f32 -0.5, %v2027
      %v2118 = vadd.f32 %v2117, 1.0
      %v2119 = vmul.f32 %v2118, %v2027
      %v2120 = vand.u32 2147483647, %v2027
      %vm2121 = vcmp.lt.f32.partialorder %v2120, 0.0004427343
      %v2122 = vsel %vm2121, %v2119, %v2116
      %v2123 = vadd.f32 %v2029, 1.0
      %v2124 = vlog2.pop %v2123
      %v2125 = vmul.f32 %v2124, 0.6931472
      %v2126 = vmul.f32 -0.5, %v2029
      %v2127 = vadd.f32 %v2126, 1.0
      %v2128 = vmul.f32 %v2127, %v2029
      %v2129 = vand.u32 2147483647, %v2029
      %vm2130 = vcmp.lt.f32.partialorder %v2129, 0.0004427343
      %v2131 = vsel %vm2130, %v2128, %v2125
      %v2132 = vadd.f32 %v2031, 1.0
      %v2133 = vlog2.pop %v2132
      %v2134 = vmul.f32 %v2133, 0.6931472
      %v2135 = vmul.f32 -0.5, %v2031
      %v2136 = vadd.f32 %v2135, 1.0
      %v2137 = vmul.f32 %v2136, %v2031
      %v2138 = vand.u32 2147483647, %v2031
      %vm2139 = vcmp.lt.f32.partialorder %v2138, 0.0004427343
      %v2140 = vsel %vm2139, %v2137, %v2134
      %v2141 = vadd.f32 %v2033, 1.0
      %v2142 = vlog2.pop %v2141
      %v2143 = vmul.f32 %v2142, 0.6931472
      %v2144 = vmul.f32 -0.5, %v2033
      %v2145 = vadd.f32 %v2144, 1.0
      %v2146 = vmul.f32 %v2145, %v2033
      %v2147 = vand.u32 2147483647, %v2033
      %vm2148 = vcmp.lt.f32.partialorder %v2147, 0.0004427343
      %v2149 = vsel %vm2148, %v2146, %v2143
      %v2150 = vadd.f32 %v2035, 1.0
      %v2151 = vlog2.pop %v2150
      %v2152 = vmul.f32 %v2151, 0.6931472
      %v2153 = vmul.f32 -0.5, %v2035
      %v2154 = vadd.f32 %v2153, 1.0
      %v2155 = vmul.f32 %v2154, %v2035
      %v2156 = vand.u32 2147483647, %v2035
      %vm2157 = vcmp.lt.f32.partialorder %v2156, 0.0004427343
      %v2158 = vsel %vm2157, %v2155, %v2152
      %v2159 = vadd.f32 %v2037, 1.0
      %v2160 = vlog2.pop %v2159
      %v2161 = vmul.f32 %v2160, 0.6931472
      %v2162 = vmul.f32 -0.5, %v2037
      %v2163 = vadd.f32 %v2162, 1.0
      %v2164 = vmul.f32 %v2163, %v2037
      %v2165 = vand.u32 2147483647, %v2037
      %vm2166 = vcmp.lt.f32.partialorder %v2165, 0.0004427343
      %v2167 = vsel %vm2166, %v2164, %v2161
      %v2168 = vadd.f32 %v2039, 1.0
      %v2169 = vlog2.pop %v2168
      %v2170 = vmul.f32 %v2169, 0.6931472
      %v2171 = vmul.f32 -0.5, %v2039
      %v2172 = vadd.f32 %v2171, 1.0
      %v2173 = vmul.f32 %v2172, %v2039
      %v2174 = vand.u32 2147483647, %v2039
      %vm2175 = vcmp.lt.f32.partialorder %v2174, 0.0004427343
      %v2176 = vsel %vm2175, %v2173, %v2170
      %v2177 = vadd.f32 %v2041, 1.0
      %v2178 = vlog2.pop %v2177
      %v2179 = vmul.f32 %v2178, 0.6931472
      %v2180 = vmul.f32 -0.5, %v2041
      %v2181 = vadd.f32 %v2180, 1.0
      %v2182 = vmul.f32 %v2181, %v2041
      %v2183 = vand.u32 2147483647, %v2041
      %vm2184 = vcmp.lt.f32.partialorder %v2183, 0.0004427343
      %v2185 = vsel %vm2184, %v2182, %v2179
      %v2186 = vadd.f32 %v1962, %v2050
      %v2187 = vadd.f32 %v1963, %v2059
      %v2188 = vadd.f32 %v1964, %v2068
      %v2189 = vadd.f32 %v1965, %v2077
      %v2190 = vadd.f32 %v1966, %v2086
      %v2191 = vadd.f32 %v1967, %v2095
      %v2192 = vadd.f32 %v1968, %v2104
      %v2193 = vadd.f32 %v1969, %v2113
      %v2194 = vadd.f32 %v1970, %v2122
      %v2195 = vadd.f32 %v1971, %v2131
      %v2196 = vadd.f32 %v1972, %v2140
      %v2197 = vadd.f32 %v1973, %v2149
      %v2198 = vadd.f32 %v1974, %v2158
      %v2199 = vadd.f32 %v1975, %v2167
      %v2200 = vadd.f32 %v1976, %v2176
      %v2201 = vadd.f32 %v1977, %v2185
      %2218 = vrot.lane.b32.xlu0 %v2186, 96
      %v2219 = vpop.permute.xlu0 %2218
      %2220 = vrot.lane.b32.xlu0 %v2187, 96
      %v2221 = vpop.permute.xlu0 %2220
      %2222 = vrot.lane.b32.xlu0 %v2188, 96
      %v2223 = vpop.permute.xlu0 %2222
      %2224 = vrot.lane.b32.xlu0 %v2189, 96
      %v2225 = vpop.permute.xlu0 %2224
      %2226 = vrot.lane.b32.xlu0 %v2190, 96
      %v2227 = vpop.permute.xlu0 %2226
      %2228 = vrot.lane.b32.xlu0 %v2191, 96
      %v2229 = vpop.permute.xlu0 %2228
      %2230 = vrot.lane.b32.xlu0 %v2192, 96
      %v2231 = vpop.permute.xlu0 %2230
      %2232 = vrot.lane.b32.xlu0 %v2193, 96
      %v2233 = vpop.permute.xlu0 %2232
      %2234 = vrot.lane.b32.xlu0 %v2194, 96
      %v2235 = vpop.permute.xlu0 %2234
      %2236 = vrot.lane.b32.xlu0 %v2195, 96
      %v2237 = vpop.permute.xlu0 %2236
      %2238 = vrot.lane.b32.xlu0 %v2196, 96
      %v2239 = vpop.permute.xlu0 %2238
      %2240 = vrot.lane.b32.xlu0 %v2197, 96
      %v2241 = vpop.permute.xlu0 %2240
      %2242 = vrot.lane.b32.xlu0 %v2198, 96
      %v2243 = vpop.permute.xlu0 %2242
      %2244 = vrot.lane.b32.xlu0 %v2199, 96
      %v2245 = vpop.permute.xlu0 %2244
      %2246 = vrot.lane.b32.xlu0 %v2200, 96
      %v2247 = vpop.permute.xlu0 %2246
      %2248 = vrot.lane.b32.xlu0 %v2201, 96
      %v2249 = vpop.permute.xlu0 %2248
      %v2266 = vmul.f32 %v1931, %v2219
      %v2267 = vmul.f32 %v1933, %v2221
      %v2268 = vmul.f32 %v1935, %v2223
      %v2269 = vmul.f32 %v1937, %v2225
      %v2270 = vmul.f32 %v1939, %v2227
      %v2271 = vmul.f32 %v1941, %v2229
      %v2272 = vmul.f32 %v1943, %v2231
      %v2273 = vmul.f32 %v1945, %v2233
      %v2274 = vmul.f32 %v1947, %v2235
      %v2275 = vmul.f32 %v1949, %v2237
      %v2276 = vmul.f32 %v1951, %v2239
      %v2277 = vmul.f32 %v1953, %v2241
      %v2278 = vmul.f32 %v1955, %v2243
      %v2279 = vmul.f32 %v1957, %v2245
      %v2280 = vmul.f32 %v1959, %v2247
      %v2281 = vmul.f32 %v1961, %v2249
      %v2282 = vlaneseq
      %v2283 = vshrl.u32 %v2282, 7
      %v2284 = vadd.s32 %v2283, 8
      %v2285 = vadd.s32 %v2283, 16
      %v2286 = vadd.s32 %v2283, 24
      %v2287 = vadd.s32 %v2283, 32
      %v2288 = vadd.s32 %v2283, 40
      %v2289 = vadd.s32 %v2283, 48
      %v2290 = vadd.s32 %v2283, 56
      %v2291 = vld [vmem:[%s479] sm:$0x1]
      %v2292 = vlaneseq
      %v2293 = vshrl.u32 %v2292, 7
      %v2294 = vsub.s32 0, %v2293
      %v2295 = vrot.slane %v2291, %v2294
      %vm2296 = vcmp.eq.s32.totalorder %v2283, %v2295
      %vm2297 = vcmp.eq.s32.totalorder %v2284, %v2295
      %vm2298 = vcmp.eq.s32.totalorder %v2285, %v2295
      %vm2299 = vcmp.eq.s32.totalorder %v2286, %v2295
      %vm2300 = vcmp.eq.s32.totalorder %v2287, %v2295
      %vm2301 = vcmp.eq.s32.totalorder %v2288, %v2295
      %vm2302 = vcmp.eq.s32.totalorder %v2289, %v2295
      %vm2303 = vcmp.eq.s32.totalorder %v2290, %v2295
      %v2304 = vsel %vm2296, 1, 0
      %v2305 = vsel %vm2297, 1, 0
      %v2306 = vsel %vm2298, 1, 0
      %v2307 = vsel %vm2299, 1, 0
      %v2308 = vsel %vm2300, 1, 0
      %v2309 = vsel %vm2301, 1, 0
      %v2310 = vsel %vm2302, 1, 0
      %v2311 = vsel %vm2303, 1, 0
      %v2312 = vcvt.s32.f32 %v2304
      %v2313 = vcvt.s32.f32 %v2305
      %v2314 = vcvt.s32.f32 %v2306
      %v2315 = vcvt.s32.f32 %v2307
      %v2316 = vcvt.s32.f32 %v2308
      %v2317 = vcvt.s32.f32 %v2309
      %v2318 = vcvt.s32.f32 %v2310
      %v2319 = vcvt.s32.f32 %v2311
      %v2320 = vld [vmem:[#allocation3] sm:$0xff]
      %v2321 = vld [vmem:[#allocation3 + $0x8] sm:$0xff]
      %v2322 = vld [vmem:[#allocation3 + $0x10] sm:$0xff]
      %v2323 = vld [vmem:[#allocation3 + $0x18] sm:$0xff]
      %v2324 = vld [vmem:[#allocation3 + $0x20] sm:$0xff]
      %v2325 = vld [vmem:[#allocation3 + $0x28] sm:$0xff]
      %v2326 = vld [vmem:[#allocation3 + $0x30] sm:$0xff]
      %v2327 = vld [vmem:[#allocation3 + $0x38] sm:$0xff]
      %2328 = vmatprep.subr.mxu0 0.0
      %2329 = vmatpush1.msra.mxu0 %v2266
      %2330 = vmatprep.subr.mxu0 0.0
      %2331 = vmatpush1.msra.mxu0 %v2267
      %2332 = vmatprep.subr.mxu0 0.0
      %2333 = vmatpush1.msra.mxu0 %v2268
      %2334 = vmatprep.subr.mxu0 0.0
      %2335 = vmatpush1.msra.mxu0 %v2269
      %2336 = vmatprep.subr.mxu0 0.0
      %2337 = vmatpush1.msra.mxu0 %v2270
      %2338 = vmatprep.subr.mxu0 0.0
      %2339 = vmatpush1.msra.mxu0 %v2271
      %2340 = vmatprep.subr.mxu0 0.0
      %2341 = vmatpush1.msra.mxu0 %v2272
      %2342 = vmatprep.subr.mxu0 0.0
      %2343 = vmatpush1.msra.mxu0 %v2273
      %2344 = vmatprep.subr.mxu0 0.0
      %2345 = vmatpush1.msra.mxu0 %v2274
      %2346 = vmatprep.subr.mxu0 0.0
      %2347 = vmatpush1.msra.mxu0 %v2275
      %2348 = vmatprep.subr.mxu0 0.0
      %2349 = vmatpush1.msra.mxu0 %v2276
      %2350 = vmatprep.subr.mxu0 0.0
      %2351 = vmatpush1.msra.mxu0 %v2277
      %2352 = vmatprep.subr.mxu0 0.0
      %2353 = vmatpush1.msra.mxu0 %v2278
      %2354 = vmatprep.subr.mxu0 0.0
      %2355 = vmatpush1.msra.mxu0 %v2279
      %2356 = vmatprep.subr.mxu0 0.0
      %2357 = vmatpush1.msra.mxu0 %v2280
      %2358 = vmatprep.subr.mxu0 0.0
      %2359 = vmatpush1.msra.mxu0 %v2281
      %2360 = vmatprep.subr.mxu0 0.0
      %2361 = vmatpush1.msra.mxu0 0.0
      %2362 = vmatprep.subr.mxu0 0.0
      %2363 = vmatpush1.msra.mxu0 0.0
      %2364 = vmatprep.subr.mxu0 0.0
      %2365 = vmatpush1.msra.mxu0 0.0
      %2366 = vmatprep.subr.mxu0 0.0
      %2367 = vmatpush1.msra.mxu0 0.0
      %2368 = vmatprep.subr.mxu0 0.0
      %2369 = vmatpush1.msra.mxu0 0.0
      %2370 = vmatprep.subr.mxu0 0.0
      %2371 = vmatpush1.msra.mxu0 0.0
      %2372 = vmatprep.subr.mxu0 0.0
      %2373 = vmatpush1.msra.mxu0 0.0
      %2374 = vmatprep.subr.mxu0 0.0
      %2375 = vmatpush1.msra.mxu0 0.0
      %2376 = vmatprep.subr.mxu0 0.0
      %2377 = vmatpush1.msra.mxu0 0.0
      %2378 = vmatprep.subr.mxu0 0.0
      %2379 = vmatpush1.msra.mxu0 0.0
      %2380 = vmatprep.subr.mxu0 0.0
      %2381 = vmatpush1.msra.mxu0 0.0
      %2382 = vmatprep.subr.mxu0 0.0
      %2383 = vmatpush1.msra.mxu0 0.0
      %2384 = vmatprep.subr.mxu0 0.0
      %2385 = vmatpush1.msra.mxu0 0.0
      %2386 = vmatprep.subr.mxu0 0.0
      %2387 = vmatpush1.msra.mxu0 0.0
      %2388 = vmatprep.subr.mxu0 0.0
      %2389 = vmatpush1.msra.mxu0 0.0
      %2390 = vmatprep.subr.mxu0 0.0
      %2391 = vmatpush1.msra.mxu0 0.0
      %2392 = vmatprep.mubr.f32.mxu0 0.0
      %2393 = vmatmul.mubr.f32.gmra.mrb[0].mxu0 %v2312
      %v2394 = vpop.f32.mrb[0].mxu0
      %v2395 = vadd.f32 0.0, %v2394
      %v2396 = vpop.f32.mrb[0].mxu0
      %2397 = vmatprep.mubr.f32.mxu0 0.0
      %2398 = vmatmul.mubr.f32.gmra.mrb[0].mxu0 %v2313
      %v2399 = vpop.f32.mrb[0].mxu0
      %v2400 = vadd.f32 0.0, %v2399
      %v2401 = vpop.f32.mrb[0].mxu0
      %2402 = vmatprep.mubr.f32.mxu0 0.0
      %2403 = vmatmul.mubr.f32.gmra.mrb[0].mxu0 %v2314
      %v2404 = vpop.f32.mrb[0].mxu0
      %v2405 = vadd.f32 0.0, %v2404
      %v2406 = vpop.f32.mrb[0].mxu0
      %2407 = vmatprep.mubr.f32.mxu0 0.0
      %2408 = vmatmul.mubr.f32.gmra.mrb[0].mxu0 %v2315
      %v2409 = vpop.f32.mrb[0].mxu0
      %v2410 = vadd.f32 0.0, %v2409
      %v2411 = vpop.f32.mrb[0].mxu0
      %2412 = vmatprep.mubr.f32.mxu0 0.0
      %2413 = vmatmul.mubr.f32.gmra.mrb[0].mxu0 %v2316
      %v2414 = vpop.f32.mrb[0].mxu0
      %v2415 = vadd.f32 0.0, %v2414
      %v2416 = vpop.f32.mrb[0].mxu0
      %2417 = vmatprep.mubr.f32.mxu0 0.0
      %2418 = vmatmul.mubr.f32.gmra.mrb[0].mxu0 %v2317
      %v2419 = vpop.f32.mrb[0].mxu0
      %v2420 = vadd.f32 0.0, %v2419
      %v2421 = vpop.f32.mrb[0].mxu0
      %2422 = vmatprep.mubr.f32.mxu0 0.0
      %2423 = vmatmul.mubr.f32.gmra.mrb[0].mxu0 %v2318
      %v2424 = vpop.f32.mrb[0].mxu0
      %v2425 = vadd.f32 0.0, %v2424
      %v2426 = vpop.f32.mrb[0].mxu0
      %2427 = vmatprep.mubr.f32.mxu0 0.0
      %2428 = vmatmul.mubr.f32.gmra.mrb[0].mxu0 %v2319
      %v2429 = vpop.f32.mrb[0].mxu0
      %v2430 = vadd.f32 0.0, %v2429
      %v2431 = vpop.f32.mrb[0].mxu0
      %2432 = vdwg.mxu0
      %v2433 = vadd.f32 %v2320, %v2395
      %v2434 = vadd.f32 %v2321, %v2400
      %v2435 = vadd.f32 %v2322, %v2405
      %v2436 = vadd.f32 %v2323, %v2410
      %v2437 = vadd.f32 %v2324, %v2415
      %v2438 = vadd.f32 %v2325, %v2420
      %v2439 = vadd.f32 %v2326, %v2425
      %v2440 = vadd.f32 %v2327, %v2430
      %2441 = vst.msk [vmem:[#allocation3] sm:$0xff] %vm1225, %v2433
      %2442 = vst.msk [vmem:[#allocation3 + $0x8] sm:$0xff] %vm1225, %v2434
      %2443 = vst.msk [vmem:[#allocation3 + $0x10] sm:$0xff] %vm1225, %v2435
      %2444 = vst.msk [vmem:[#allocation3 + $0x18] sm:$0xff] %vm1225, %v2436
      %2445 = vst.msk [vmem:[#allocation3 + $0x20] sm:$0xff] %vm1225, %v2437
      %2446 = vst.msk [vmem:[#allocation3 + $0x28] sm:$0xff] %vm1225, %v2438
      %2447 = vst.msk [vmem:[#allocation3 + $0x30] sm:$0xff] %vm1225, %v2439
      %2448 = vst.msk [vmem:[#allocation3 + $0x38] sm:$0xff] %vm1225, %v2440
      %p2449 = scmp.eq.s32.totalorder %s24, 1
      // Predicated region
      $region77: #{tpu_custom_call.1} parent=71 // pred_check
        %p2450 = pneg %p2449
      $region78: #{tpu_custom_call.1} parent=71 // pred_check_branch
        %2452 = sbr.rel (%p2450) target = $region80
      $region79: #{tpu_custom_call.1} parent=71 // pred_region
        %v2453 = vld [vmem:[#allocation2] sm:$0xff]
        %v2454 = vld [vmem:[#allocation2 + $0x8] sm:$0xff]
        %v2455 = vld [vmem:[#allocation2 + $0x10] sm:$0xff]
        %v2456 = vld [vmem:[#allocation2 + $0x18] sm:$0xff]
        %v2457 = vld [vmem:[#allocation2 + $0x20] sm:$0xff]
        %v2458 = vld [vmem:[#allocation2 + $0x28] sm:$0xff]
        %v2459 = vld [vmem:[#allocation2 + $0x30] sm:$0xff]
        %v2460 = vld [vmem:[#allocation2 + $0x38] sm:$0xff]
        %v2461 = vld [vmem:[#allocation3] sm:$0xff]
        %v2462 = vld [vmem:[#allocation3 + $0x8] sm:$0xff]
        %v2463 = vld [vmem:[#allocation3 + $0x10] sm:$0xff]
        %v2464 = vld [vmem:[#allocation3 + $0x18] sm:$0xff]
        %v2465 = vld [vmem:[#allocation3 + $0x20] sm:$0xff]
        %v2466 = vld [vmem:[#allocation3 + $0x28] sm:$0xff]
        %v2467 = vld [vmem:[#allocation3 + $0x30] sm:$0xff]
        %v2468 = vld [vmem:[#allocation3 + $0x38] sm:$0xff]
        %v2469 = vadd.f32 %v2453, %v2461
        %v2470 = vadd.f32 %v2454, %v2462
        %v2471 = vadd.f32 %v2455, %v2463
        %v2472 = vadd.f32 %v2456, %v2464
        %v2473 = vadd.f32 %v2457, %v2465
        %v2474 = vadd.f32 %v2458, %v2466
        %v2475 = vadd.f32 %v2459, %v2467
        %v2476 = vadd.f32 %v2460, %v2468
        %v2477 = vld [vmem:[%s11] sm:$0xff]
        %v2478 = vld [vmem:[%s11 + $0x8] sm:$0xff]
        %v2479 = vld [vmem:[%s11 + $0x10] sm:$0xff]
        %v2480 = vld [vmem:[%s11 + $0x18] sm:$0xff]
        %v2481 = vld [vmem:[%s12] sm:$0x1]
        %v2483 = vlaneseq
        %v2484 = vshrl.u32 %v2483, 7
        %v2485 = vsub.s32 0, %v2484
        %v2486 = vrot.slane %v2481, %v2485
        %v2489 = vsel %vm1225, %v2469, 0
        %v2492 = vsel %vm1225, %v2470, 0
        %v2495 = vsel %vm1225, %v2471, 0
        %v2498 = vsel %vm1225, %v2472, 0
        %v2501 = vsel %vm1225, %v2473, 0
        %v2504 = vsel %vm1225, %v2474, 0
        %v2507 = vsel %vm1225, %v2475, 0
        %v2510 = vsel %vm1225, %v2476, 0
        %2512 = vmatprep.subr.mxu0 0.0
        %2513 = vmatpush1.msra.mxu0 %v2477
        %2514 = vmatprep.subr.mxu0 0.0
        %2515 = vmatpush1.msra.mxu0 %v2478
        %2516 = vmatprep.subr.mxu0 0.0
        %2517 = vmatpush1.msra.mxu0 %v2479
        %2518 = vmatprep.subr.mxu0 0.0
        %2519 = vmatpush1.msra.mxu0 %v2480
        %2520 = vmatprep.subr.mxu0 0.0
        %2521 = vmatpush1.msra.mxu0 0.0
        %2522 = vmatprep.subr.mxu0 0.0
        %2523 = vmatpush1.msra.mxu0 0.0
        %2524 = vmatprep.subr.mxu0 0.0
        %2525 = vmatpush1.msra.mxu0 0.0
        %2526 = vmatprep.subr.mxu0 0.0
        %2527 = vmatpush1.msra.mxu0 0.0
        %2528 = vmatprep.subr.mxu0 0.0
        %2529 = vmatpush1.msra.mxu0 0.0
        %2530 = vmatprep.subr.mxu0 0.0
        %2531 = vmatpush1.msra.mxu0 0.0
        %2532 = vmatprep.subr.mxu0 0.0
        %2533 = vmatpush1.msra.mxu0 0.0
        %2534 = vmatprep.subr.mxu0 0.0
        %2535 = vmatpush1.msra.mxu0 0.0
        %2536 = vmatprep.subr.mxu0 0.0
        %2537 = vmatpush1.msra.mxu0 0.0
        %2538 = vmatprep.subr.mxu0 0.0
        %2539 = vmatpush1.msra.mxu0 0.0
        %2540 = vmatprep.subr.mxu0 0.0
        %2541 = vmatpush1.msra.mxu0 0.0
        %2542 = vmatprep.subr.mxu0 0.0
        %2543 = vmatpush1.msra.mxu0 0.0
        %2544 = vmatprep.subr.mxu0 0.0
        %2545 = vmatpush1.msra.mxu0 0.0
        %2546 = vmatprep.subr.mxu0 0.0
        %2547 = vmatpush1.msra.mxu0 0.0
        %2548 = vmatprep.subr.mxu0 0.0
        %2549 = vmatpush1.msra.mxu0 0.0
        %2550 = vmatprep.subr.mxu0 0.0
        %2551 = vmatpush1.msra.mxu0 0.0
        %2552 = vmatprep.subr.mxu0 0.0
        %2553 = vmatpush1.msra.mxu0 0.0
        %2554 = vmatprep.subr.mxu0 0.0
        %2555 = vmatpush1.msra.mxu0 0.0
        %2556 = vmatprep.subr.mxu0 0.0
        %2557 = vmatpush1.msra.mxu0 0.0
        %2558 = vmatprep.subr.mxu0 0.0
        %2559 = vmatpush1.msra.mxu0 0.0
        %2560 = vmatprep.subr.mxu0 0.0
        %2561 = vmatpush1.msra.mxu0 0.0
        %2562 = vmatprep.subr.mxu0 0.0
        %2563 = vmatpush1.msra.mxu0 0.0
        %2564 = vmatprep.subr.mxu0 0.0
        %2565 = vmatpush1.msra.mxu0 0.0
        %2566 = vmatprep.subr.mxu0 0.0
        %2567 = vmatpush1.msra.mxu0 0.0
        %2568 = vmatprep.subr.mxu0 0.0
        %2569 = vmatpush1.msra.mxu0 0.0
        %2570 = vmatprep.subr.mxu0 0.0
        %2571 = vmatpush1.msra.mxu0 0.0
        %2572 = vmatprep.subr.mxu0 0.0
        %2573 = vmatpush1.msra.mxu0 0.0
        %2574 = vmatprep.subr.mxu0 0.0
        %2575 = vmatpush1.msra.mxu0 0.0
        %2576 = vmatprep.mubr.f32.mxu0 0.0
        %2577 = vmatmul.mubr.f32.gmra.mrb[0].mxu0 %v2489
        %v2578 = vpop.f32.mrb[0].mxu0
        %v2579 = vadd.f32 %v2486, %v2578
        %v2580 = vpop.f32.mrb[0].mxu0
        %2581 = vmatprep.mubr.f32.mxu0 0.0
        %2582 = vmatmul.mubr.f32.gmra.mrb[0].mxu0 %v2492
        %v2583 = vpop.f32.mrb[0].mxu0
        %v2584 = vadd.f32 %v2486, %v2583
        %v2585 = vpop.f32.mrb[0].mxu0
        %2586 = vmatprep.mubr.f32.mxu0 0.0
        %2587 = vmatmul.mubr.f32.gmra.mrb[0].mxu0 %v2495
        %v2588 = vpop.f32.mrb[0].mxu0
        %v2589 = vadd.f32 %v2486, %v2588
        %v2590 = vpop.f32.mrb[0].mxu0
        %2591 = vmatprep.mubr.f32.mxu0 0.0
        %2592 = vmatmul.mubr.f32.gmra.mrb[0].mxu0 %v2498
        %v2593 = vpop.f32.mrb[0].mxu0
        %v2594 = vadd.f32 %v2486, %v2593
        %v2595 = vpop.f32.mrb[0].mxu0
        %2596 = vmatprep.mubr.f32.mxu0 0.0
        %2597 = vmatmul.mubr.f32.gmra.mrb[0].mxu0 %v2501
        %v2598 = vpop.f32.mrb[0].mxu0
        %v2599 = vadd.f32 %v2486, %v2598
        %v2600 = vpop.f32.mrb[0].mxu0
        %2601 = vmatprep.mubr.f32.mxu0 0.0
        %2602 = vmatmul.mubr.f32.gmra.mrb[0].mxu0 %v2504
        %v2603 = vpop.f32.mrb[0].mxu0
        %v2604 = vadd.f32 %v2486, %v2603
        %v2605 = vpop.f32.mrb[0].mxu0
        %2606 = vmatprep.mubr.f32.mxu0 0.0
        %2607 = vmatmul.mubr.f32.gmra.mrb[0].mxu0 %v2507
        %v2608 = vpop.f32.mrb[0].mxu0
        %v2609 = vadd.f32 %v2486, %v2608
        %v2610 = vpop.f32.mrb[0].mxu0
        %2611 = vmatprep.mubr.f32.mxu0 0.0
        %2612 = vmatmul.mubr.f32.gmra.mrb[0].mxu0 %v2510
        %v2613 = vpop.f32.mrb[0].mxu0
        %v2614 = vadd.f32 %v2486, %v2613
        %v2615 = vpop.f32.mrb[0].mxu0
        %2616 = vdwg.mxu0
        %v2617 = vmax.f32 %v2579, 0.0
        %v2618 = vmax.f32 %v2584, 0.0
        %v2619 = vmax.f32 %v2589, 0.0
        %v2620 = vmax.f32 %v2594, 0.0
        %v2621 = vmax.f32 %v2599, 0.0
        %v2622 = vmax.f32 %v2604, 0.0
        %v2623 = vmax.f32 %v2609, 0.0
        %v2624 = vmax.f32 %v2614, 0.0
        %2625 = vst.msk [vmem:[%s13] sm:$0xff] %vm1225, %v2617
        %2626 = vst.msk [vmem:[%s13 + $0x8] sm:$0xff] %vm1225, %v2618
        %2627 = vst.msk [vmem:[%s13 + $0x10] sm:$0xff] %vm1225, %v2619
        %2628 = vst.msk [vmem:[%s13 + $0x18] sm:$0xff] %vm1225, %v2620
        %2629 = vst.msk [vmem:[%s13 + $0x20] sm:$0xff] %vm1225, %v2621
        %2630 = vst.msk [vmem:[%s13 + $0x28] sm:$0xff] %vm1225, %v2622
        %2631 = vst.msk [vmem:[%s13 + $0x30] sm:$0xff] %vm1225, %v2623
        %2632 = vst.msk [vmem:[%s13 + $0x38] sm:$0xff] %vm1225, %v2624
      $region80: #{tpu_custom_call.1} parent=71 // pred_fallthru
        _
      // Predicated region
      $region81: #{tpu_custom_call.1} parent=71 // pred_check
        %p2633 = pneg %p330
      $region82: #{tpu_custom_call.1} parent=71 // pred_check_branch
        %2635 = sbr.rel (%p2633) target = $region84
      $region83: #{tpu_custom_call.1} parent=71 // pred_region
        _
      $region84: #{tpu_custom_call.1} parent=71 // pred_fallthru
        _
      // Predicated region
      $region85: #{tpu_custom_call.1} parent=71 // pred_check
        %p2636 = pneg %p330
      $region86: #{tpu_custom_call.1} parent=71 // pred_check_branch
        %2638 = sbr.rel (%p2636) target = $region88
      $region87: #{tpu_custom_call.1} parent=71 // pred_region
        _
      $region88: #{tpu_custom_call.1} parent=71 // pred_fallthru
        _
    $region72: #{tpu_custom_call.1} parent=5 // pred_fallthru
      _
    %p2639 = scmp.le.s32.totalorder 2, %s19
    // Predicated region
    $region89: #{tpu_custom_call.1} parent=5 // pred_check
      %p2640 = pneg %p2639
    $region90: #{tpu_custom_call.1} parent=5 // pred_check_branch
      %2642 = sbr.rel (%p2640) target = $region92
    $region91: #{tpu_custom_call.1} parent=5 // pred_region
      %s2643 = ssub.s32 %s19, 2
    $region92: #{tpu_custom_call.1} parent=5 // pred_fallthru
      _
  $region6: #{tpu_custom_call.1} parent=0 // loop_footer
    %s23 = sadd.s32 1, %s19
  $region7: #{tpu_custom_call.1} parent=0 // loop_footer_branch
    %18 = sbr.rel target = $region3
  $region8: #{tpu_custom_call.1} parent=0 // loop_exit
    _

</llo_original>
